<compile_context>
chip_gen: v5e
topology: v5e:2x2
jax: 0.10.0
libtpu: 0.0.40
codegen_flags: <defaults>
</compile_context>

<pallas_src>
import jax
import jax.numpy as jnp
from jax.experimental import pallas as pl
from jax.experimental.pallas import tpu as pltpu


_LANE = 128
_SUBLANE = 8


# --------------------------------------------------------------------------- #
# Kernel
# --------------------------------------------------------------------------- #
def gin_kernel(a_ref, x_ref,
               w1a_ref, b1a_ref, w1b_ref, b1b_ref,
               w2a_ref, b2a_ref, w2b_ref, b2b_ref,
               w3a_ref, b3a_ref, w3b_ref, b3b_ref,
               o_ref):
    bf16, f32 = jnp.bfloat16, jnp.float32

    a = a_ref[...]      # [NT, NT]   bf16 row-normalized adjacency (mean agg, block-diag per tile)
    x = x_ref[...]      # [NT, Finp] bf16 node features (lane-padded)

    def linear(h_bf16, w_ref, b_ref):
        # bf16 MXU operands, f32 accumulation, f32 bias add fused in the epilogue.
        return jnp.dot(h_bf16, w_ref[...], preferred_element_type=f32) + b_ref[...]

    def linear_relu(h_bf16, w_ref, b_ref):
        return jnp.maximum(linear(h_bf16, w_ref, b_ref), 0.0)

    # --- GIN layer 1:  h = (1+eps)*x + mean_{j in N(i)} x_j,  eps = 0 ---
    h1 = (x.astype(f32) + jnp.dot(a, x, preferred_element_type=f32)).astype(bf16)
    x1 = jnp.maximum(
        linear(linear_relu(h1, w1a_ref, b1a_ref).astype(bf16), w1b_ref, b1b_ref),
        0.0)                                   # outer F.relu
    x1_bf = x1.astype(bf16)                    # single bf16 copy, reused twice

    # --- GIN layer 2 ---
    h2 = (x1 + jnp.dot(a, x1_bf, preferred_element_type=f32)).astype(bf16)
    x2 = jnp.maximum(
        linear(linear_relu(h2, w2a_ref, b2a_ref).astype(bf16), w2b_ref, b2b_ref),
        0.0)                                   # outer F.relu
    x2_bf = x2.astype(bf16)

    # --- final MLP (no outer relu) ---
    out = linear(linear_relu(x2_bf, w3a_ref, b3a_ref).astype(bf16), w3b_ref, b3b_ref)

    # Lane-dense bf16 store: unmasked vst, half the f32 HBM writeback bytes.
    o_ref[...] = out.astype(o_ref.dtype)


# --------------------------------------------------------------------------- #
# Wrapper
# --------------------------------------------------------------------------- #
def _round_up(n, m):
    return ((n + m - 1) // m) * m


def _pad2(m, rows, cols, dtype):
    """Zero-pad a 2-D array to (rows, cols) and cast."""
    out = jnp.zeros((rows, cols), dtype)
    return out.at[:m.shape[0], :m.shape[1]].set(m.astype(dtype))


def gin_forward(a_norm, x, params):
    """a_norm: [T, NT, NT] f32 row-normalized (mean) adjacency, block-diagonal
    within each tile over independent graphs.  x: [T, NT, in_feats] f32."""
    t, nt, _ = a_norm.shape
    in_feats = x.shape[-1]
    hidden = params["w1a"].shape[1]
    out_feats = params["w3b"].shape[1]
    assert nt % _SUBLANE == 0, "node tile must be sublane-aligned"
    # Padded node rows (if any) would pick up relu(bias) garbage; we require
    # exact tiles so that never arises.
    assert x.shape[:2] == (t, nt)

    fin_p = _round_up(in_feats, _LANE)
    hid_p = _round_up(hidden, _LANE)
    out_p = _round_up(out_feats, _LANE)

    bf16, f32 = jnp.bfloat16, jnp.float32

    # bf16 MXU operands; f32 biases (padded lanes are zero, so padding is inert).
    a_p = a_norm.astype(bf16)
    x_p = jnp.zeros((t, nt, fin_p), bf16).at[:, :, :in_feats].set(x.astype(bf16))

    w1a = _pad2(params["w1a"], fin_p, hid_p, bf16); b1a = _pad2(params["b1a"], 1, hid_p, f32)
    w1b = _pad2(params["w1b"], hid_p, hid_p, bf16); b1b = _pad2(params["b1b"], 1, hid_p, f32)
    w2a = _pad2(params["w2a"], hid_p, hid_p, bf16); b2a = _pad2(params["b2a"], 1, hid_p, f32)
    w2b = _pad2(params["w2b"], hid_p, hid_p, bf16); b2b = _pad2(params["b2b"], 1, hid_p, f32)
    w3a = _pad2(params["w3a"], hid_p, hid_p, bf16); b3a = _pad2(params["b3a"], 1, hid_p, f32)
    w3b = _pad2(params["w3b"], hid_p, out_p, bf16); b3b = _pad2(params["b3b"], 1, out_p, f32)

    weights = (w1a, b1a, w1b, b1b, w2a, b2a, w2b, b2b, w3a, b3a, w3b, b3b)

    # Per-tile (pipelined) inputs: adjacency + features, tiled along the grid.
    in_specs = [
        pl.BlockSpec((None, nt, nt), lambda ti: (ti, 0, 0)),      # adjacency tile
        pl.BlockSpec((None, nt, fin_p), lambda ti: (ti, 0, 0)),   # feature tile
    ]
    # Weights/biases: constant block index -> DMA'd once, resident in VMEM.
    in_specs += [pl.BlockSpec(w.shape, lambda ti: (0, 0)) for w in weights]

    out_spec = pl.BlockSpec((None, nt, out_p), lambda ti: (ti, 0, 0))

    # --- cost estimate (advisory, lets XLA schedule around this small call) ---
    flops_per_tile = (
        2 * nt * nt * fin_p                       # A @ X
        + 2 * nt * fin_p * hid_p                  # gin1 linear A
        + 2 * nt * hid_p * hid_p                  # gin1 linear B
        + 2 * nt * nt * hid_p                     # A @ x1
        + 3 * (2 * nt * hid_p * hid_p)            # gin2 linears + mlp linear A
        + 2 * nt * hid_p * out_p)                 # mlp linear B
    def _nbytes(arr):
        return arr.size * arr.dtype.itemsize
    tile_io_bytes = (_nbytes(a_p) + _nbytes(x_p)) // t + nt * out_p * 2
    weight_bytes = sum(_nbytes(w) for w in weights)
    cost = pl.CostEstimate(
        flops=t * flops_per_tile,
        transcendentals=0,
        bytes_accessed=t * tile_io_bytes + weight_bytes)

    # --- VMEM budget from the actual double-buffered footprint, plus headroom
    # for in-kernel f32 activations (re-derived from shapes, safe on v7x 64 MiB).
    vmem_limit = int(2 * (tile_io_bytes + weight_bytes) + 8 * nt * hid_p * 4
                     + (4 << 20))

    out_padded = pl.pallas_call(
        gin_kernel,
        out_shape=jax.ShapeDtypeStruct((t, nt, out_p), bf16),
        grid=(t,),
        in_specs=in_specs,
        out_specs=out_spec,
        compiler_params=pltpu.CompilerParams(
            dimension_semantics=("parallel",),     # tiles shard across v7x's 2 TCs
            vmem_limit_bytes=vmem_limit),
        cost_estimate=cost,
    )(a_p, x_p, *weights)

    # Slice the real output lanes back out and upcast.
    return out_padded[:, :, :out_feats].astype(f32)


# --------------------------------------------------------------------------- #
# Params / reference
# --------------------------------------------------------------------------- #
def init_params(key, in_feats, hidden_feats, out_feats):
    """Deterministic parameter init (uniform, PyTorch-Linear-like fan-in scaling)."""
    def linear_init(key, fan_in, fan_out):
        k1, k2 = jax.random.split(key)
        bound = 1.0 / jnp.sqrt(fan_in)
        w = jax.random.uniform(k1, (fan_in, fan_out), jnp.float32, -bound, bound)
        b = jax.random.uniform(k2, (1, fan_out), jnp.float32, -bound, bound)
        return w, b

    keys = jax.random.split(key, 6)
    p = {}
    p["w1a"], p["b1a"] = linear_init(keys[0], in_feats, hidden_feats)
    p["w1b"], p["b1b"] = linear_init(keys[1], hidden_feats, hidden_feats)
    p["w2a"], p["b2a"] = linear_init(keys[2], hidden_feats, hidden_feats)
    p["w2b"], p["b2b"] = linear_init(keys[3], hidden_feats, hidden_feats)
    p["w3a"], p["b3a"] = linear_init(keys[4], hidden_feats, hidden_feats)
    p["w3b"], p["b3b"] = linear_init(keys[5], hidden_feats, out_feats)
    return p


def gin_reference(a_norm, x, p):
    """Pure-JAX reference with the same bf16-operand / f32-accumulate numerics.
    a_norm: [T, NT, NT] f32, x: [T, NT, in_feats] f32."""
    bf16, f32 = jnp.bfloat16, jnp.float32

    def mm(h, w):
        return jnp.matmul(h.astype(bf16), w.astype(bf16), preferred_element_type=f32)

    def lin(h, w, b):
        return mm(h, w) + b

    xq = x.astype(bf16).astype(f32)               # kernel receives bf16 features
    h1 = xq + mm(a_norm, xq)
    x1 = jax.nn.relu(lin(jax.nn.relu(lin(h1, p["w1a"], p["b1a"])), p["w1b"], p["b1b"]))
    h2 = x1 + mm(a_norm, x1)
    x2 = jax.nn.relu(lin(jax.nn.relu(lin(h2, p["w2a"], p["b2a"])), p["w2b"], p["b2b"]))
    return lin(jax.nn.relu(lin(x2, p["w3a"], p["b3a"])), p["w3b"], p["b3b"])


# --------------------------------------------------------------------------- #
# Demo
# --------------------------------------------------------------------------- #
if __name__ == "__main__":
    key = jax.random.PRNGKey(0)
    k_adj, k_feat, k_param = jax.random.split(key, 3)

    N = 16                  # nodes per graph
    NT = 256                # nodes per tile -> 256-row MXU operands (v6e/v7x 2x256x256)
    T = 4                   # grid steps (pipelined; "parallel" on v7x's 2 TCs)
    G_PER_TILE = NT // N    # 16 independent graphs per tile
    IN_FEATS, HIDDEN, OUT_FEATS = 8, 32, 4

    # Batched random directed graphs: adj[t, i, j] = edge j -> i within tile t,
    # masked block-diagonal so each tile holds G_PER_TILE independent N-node
    # graphs, then row-normalized (mean over in-neighbors, 0 if isolated).
    blk = jnp.arange(NT) // N
    block_mask = (blk[:, None] == blk[None, :]).astype(jnp.float32)      # [NT, NT]
    adj = (jax.random.uniform(k_adj, (T, NT, NT)) < 0.3).astype(jnp.float32)
    adj = adj * block_mask
    deg = jnp.sum(adj, axis=-1, keepdims=True)
    a_norm = adj / jnp.maximum(deg, 1.0)                                  # [T, NT, NT]

    x = jax.random.normal(k_feat, (T, NT, IN_FEATS), jnp.float32)
    params = init_params(k_param, IN_FEATS, HIDDEN, OUT_FEATS)

    out = gin_forward(a_norm, x, params)
    out = jax.block_until_ready(out)

    ref = gin_reference(a_norm, x, params)
    assert out.shape == (T, NT, OUT_FEATS)
    # Kernel stores its result in bf16 (lane-dense writeback), hence the tolerance.
    assert jnp.allclose(out, ref, atol=2e-2, rtol=2e-2), "mismatch vs pure-JAX reference"

    print("KERNEL_OK")
</pallas_src>

<mosaic_0001>
module attributes {stable_mosaic.version = 11 : i64} {
  func.func @gin_kernel(%arg0: i32, %arg1: memref<1x256x256xbf16, #tpu.memory_space<vmem>>, %arg2: memref<1x256x128xbf16, #tpu.memory_space<vmem>>, %arg3: memref<128x128xbf16, #tpu.memory_space<vmem>>, %arg4: memref<1x128xf32, #tpu.memory_space<vmem>>, %arg5: memref<128x128xbf16, #tpu.memory_space<vmem>>, %arg6: memref<1x128xf32, #tpu.memory_space<vmem>>, %arg7: memref<128x128xbf16, #tpu.memory_space<vmem>>, %arg8: memref<1x128xf32, #tpu.memory_space<vmem>>, %arg9: memref<128x128xbf16, #tpu.memory_space<vmem>>, %arg10: memref<1x128xf32, #tpu.memory_space<vmem>>, %arg11: memref<128x128xbf16, #tpu.memory_space<vmem>>, %arg12: memref<1x128xf32, #tpu.memory_space<vmem>>, %arg13: memref<128x128xbf16, #tpu.memory_space<vmem>>, %arg14: memref<1x128xf32, #tpu.memory_space<vmem>>, %arg15: memref<1x256x128xbf16, #tpu.memory_space<vmem>>) attributes {dimension_semantics = [#tpu.dimension_semantics<parallel>], iteration_bounds = array<i64: 4>, scalar_prefetch = 0 : i64, scratch_operands = 0 : i64, tpu.core_type = #tpu.core_type<tc>, window_params = [{transform_indices = @transform_0, window_bounds = array<i64: 1, 256, 256>}, {transform_indices = @transform_1, window_bounds = array<i64: 1, 256, 128>}, {pipeline_mode = #tpu.pipeline_mode<synchronous>, transform_indices = @transform_2, window_bounds = array<i64: 128, 128>}, {pipeline_mode = #tpu.pipeline_mode<synchronous>, transform_indices = @transform_3, window_bounds = array<i64: 1, 128>}, {pipeline_mode = #tpu.pipeline_mode<synchronous>, transform_indices = @transform_4, window_bounds = array<i64: 128, 128>}, {pipeline_mode = #tpu.pipeline_mode<synchronous>, transform_indices = @transform_5, window_bounds = array<i64: 1, 128>}, {pipeline_mode = #tpu.pipeline_mode<synchronous>, transform_indices = @transform_6, window_bounds = array<i64: 128, 128>}, {pipeline_mode = #tpu.pipeline_mode<synchronous>, transform_indices = @transform_7, window_bounds = array<i64: 1, 128>}, {pipeline_mode = #tpu.pipeline_mode<synchronous>, transform_indices = @transform_8, window_bounds = array<i64: 128, 128>}, {pipeline_mode = #tpu.pipeline_mode<synchronous>, transform_indices = @transform_9, window_bounds = array<i64: 1, 128>}, {pipeline_mode = #tpu.pipeline_mode<synchronous>, transform_indices = @transform_10, window_bounds = array<i64: 128, 128>}, {pipeline_mode = #tpu.pipeline_mode<synchronous>, transform_indices = @transform_11, window_bounds = array<i64: 1, 128>}, {pipeline_mode = #tpu.pipeline_mode<synchronous>, transform_indices = @transform_12, window_bounds = array<i64: 128, 128>}, {pipeline_mode = #tpu.pipeline_mode<synchronous>, transform_indices = @transform_13, window_bounds = array<i64: 1, 128>}, {transform_indices = @transform_14, window_bounds = array<i64: 1, 256, 128>}]} {
    %c0 = arith.constant 0 : index
    %c0_0 = arith.constant 0 : index
    %c0_1 = arith.constant 0 : index
    %0 = vector.load %arg1[%c0, %c0_0, %c0_1] : memref<1x256x256xbf16, #tpu.memory_space<vmem>>, vector<1x256x256xbf16>
    %1 = vector.shape_cast %0 : vector<1x256x256xbf16> to vector<256x256xbf16>
    %c0_2 = arith.constant 0 : index
    %c0_3 = arith.constant 0 : index
    %c0_4 = arith.constant 0 : index
    %2 = vector.load %arg2[%c0_2, %c0_3, %c0_4] : memref<1x256x128xbf16, #tpu.memory_space<vmem>>, vector<1x256x128xbf16>
    %3 = vector.shape_cast %2 : vector<1x256x128xbf16> to vector<256x128xbf16>
    %4 = arith.extf %3 : vector<256x128xbf16> to vector<256x128xf32>
    %cst = arith.constant dense<0.000000e+00> : vector<256x128xf32>
    %5 = tpu.matmul %1, %3, %cst {dimension_numbers = #tpu.dot_dimension_numbers<[1], [0], [0], [1], [0, 0, 1, 1], [], []>} : vector<256x256xbf16>, vector<256x128xbf16>, vector<256x128xf32> -> vector<256x128xf32>
    %6 = arith.addf %4, %5 : vector<256x128xf32>
    %7 = arith.truncf %6 : vector<256x128xf32> to vector<256x128xbf16>
    %c0_5 = arith.constant 0 : index
    %c0_6 = arith.constant 0 : index
    %8 = vector.load %arg3[%c0_5, %c0_6] : memref<128x128xbf16, #tpu.memory_space<vmem>>, vector<128x128xbf16>
    %cst_7 = arith.constant dense<0.000000e+00> : vector<256x128xf32>
    %9 = tpu.matmul %7, %8, %cst_7 {dimension_numbers = #tpu.dot_dimension_numbers<[1], [0], [0], [1], [0, 0, 1, 1], [], []>} : vector<256x128xbf16>, vector<128x128xbf16>, vector<256x128xf32> -> vector<256x128xf32>
    %c0_8 = arith.constant 0 : index
    %c0_9 = arith.constant 0 : index
    %10 = vector.load %arg4[%c0_8, %c0_9] : memref<1x128xf32, #tpu.memory_space<vmem>>, vector<1x128xf32>
    %11 = vector.broadcast %10 : vector<1x128xf32> to vector<256x128xf32>
    %12 = arith.addf %9, %11 : vector<256x128xf32>
    %cst_10 = arith.constant 0.000000e+00 : f32
    %13 = vector.broadcast %cst_10 : f32 to vector<256x128xf32>
    %14 = arith.maximumf %12, %13 : vector<256x128xf32>
    %15 = arith.truncf %14 : vector<256x128xf32> to vector<256x128xbf16>
    %c0_11 = arith.constant 0 : index
    %c0_12 = arith.constant 0 : index
    %16 = vector.load %arg5[%c0_11, %c0_12] : memref<128x128xbf16, #tpu.memory_space<vmem>>, vector<128x128xbf16>
    %cst_13 = arith.constant dense<0.000000e+00> : vector<256x128xf32>
    %17 = tpu.matmul %15, %16, %cst_13 {dimension_numbers = #tpu.dot_dimension_numbers<[1], [0], [0], [1], [0, 0, 1, 1], [], []>} : vector<256x128xbf16>, vector<128x128xbf16>, vector<256x128xf32> -> vector<256x128xf32>
    %c0_14 = arith.constant 0 : index
    %c0_15 = arith.constant 0 : index
    %18 = vector.load %arg6[%c0_14, %c0_15] : memref<1x128xf32, #tpu.memory_space<vmem>>, vector<1x128xf32>
    %19 = vector.broadcast %18 : vector<1x128xf32> to vector<256x128xf32>
    %20 = arith.addf %17, %19 : vector<256x128xf32>
    %cst_16 = arith.constant 0.000000e+00 : f32
    %21 = vector.broadcast %cst_16 : f32 to vector<256x128xf32>
    %22 = arith.maximumf %20, %21 : vector<256x128xf32>
    %23 = arith.truncf %22 : vector<256x128xf32> to vector<256x128xbf16>
    %cst_17 = arith.constant dense<0.000000e+00> : vector<256x128xf32>
    %24 = tpu.matmul %1, %23, %cst_17 {dimension_numbers = #tpu.dot_dimension_numbers<[1], [0], [0], [1], [0, 0, 1, 1], [], []>} : vector<256x256xbf16>, vector<256x128xbf16>, vector<256x128xf32> -> vector<256x128xf32>
    %25 = arith.addf %22, %24 : vector<256x128xf32>
    %26 = arith.truncf %25 : vector<256x128xf32> to vector<256x128xbf16>
    %c0_18 = arith.constant 0 : index
    %c0_19 = arith.constant 0 : index
    %27 = vector.load %arg7[%c0_18, %c0_19] : memref<128x128xbf16, #tpu.memory_space<vmem>>, vector<128x128xbf16>
    %cst_20 = arith.constant dense<0.000000e+00> : vector<256x128xf32>
    %28 = tpu.matmul %26, %27, %cst_20 {dimension_numbers = #tpu.dot_dimension_numbers<[1], [0], [0], [1], [0, 0, 1, 1], [], []>} : vector<256x128xbf16>, vector<128x128xbf16>, vector<256x128xf32> -> vector<256x128xf32>
    %c0_21 = arith.constant 0 : index
    %c0_22 = arith.constant 0 : index
    %29 = vector.load %arg8[%c0_21, %c0_22] : memref<1x128xf32, #tpu.memory_space<vmem>>, vector<1x128xf32>
    %30 = vector.broadcast %29 : vector<1x128xf32> to vector<256x128xf32>
    %31 = arith.addf %28, %30 : vector<256x128xf32>
    %cst_23 = arith.constant 0.000000e+00 : f32
    %32 = vector.broadcast %cst_23 : f32 to vector<256x128xf32>
    %33 = arith.maximumf %31, %32 : vector<256x128xf32>
    %34 = arith.truncf %33 : vector<256x128xf32> to vector<256x128xbf16>
    %c0_24 = arith.constant 0 : index
    %c0_25 = arith.constant 0 : index
    %35 = vector.load %arg9[%c0_24, %c0_25] : memref<128x128xbf16, #tpu.memory_space<vmem>>, vector<128x128xbf16>
    %cst_26 = arith.constant dense<0.000000e+00> : vector<256x128xf32>
    %36 = tpu.matmul %34, %35, %cst_26 {dimension_numbers = #tpu.dot_dimension_numbers<[1], [0], [0], [1], [0, 0, 1, 1], [], []>} : vector<256x128xbf16>, vector<128x128xbf16>, vector<256x128xf32> -> vector<256x128xf32>
    %c0_27 = arith.constant 0 : index
    %c0_28 = arith.constant 0 : index
    %37 = vector.load %arg10[%c0_27, %c0_28] : memref<1x128xf32, #tpu.memory_space<vmem>>, vector<1x128xf32>
    %38 = vector.broadcast %37 : vector<1x128xf32> to vector<256x128xf32>
    %39 = arith.addf %36, %38 : vector<256x128xf32>
    %cst_29 = arith.constant 0.000000e+00 : f32
    %40 = vector.broadcast %cst_29 : f32 to vector<256x128xf32>
    %41 = arith.maximumf %39, %40 : vector<256x128xf32>
    %42 = arith.truncf %41 : vector<256x128xf32> to vector<256x128xbf16>
    %c0_30 = arith.constant 0 : index
    %c0_31 = arith.constant 0 : index
    %43 = vector.load %arg11[%c0_30, %c0_31] : memref<128x128xbf16, #tpu.memory_space<vmem>>, vector<128x128xbf16>
    %cst_32 = arith.constant dense<0.000000e+00> : vector<256x128xf32>
    %44 = tpu.matmul %42, %43, %cst_32 {dimension_numbers = #tpu.dot_dimension_numbers<[1], [0], [0], [1], [0, 0, 1, 1], [], []>} : vector<256x128xbf16>, vector<128x128xbf16>, vector<256x128xf32> -> vector<256x128xf32>
    %c0_33 = arith.constant 0 : index
    %c0_34 = arith.constant 0 : index
    %45 = vector.load %arg12[%c0_33, %c0_34] : memref<1x128xf32, #tpu.memory_space<vmem>>, vector<1x128xf32>
    %46 = vector.broadcast %45 : vector<1x128xf32> to vector<256x128xf32>
    %47 = arith.addf %44, %46 : vector<256x128xf32>
    %cst_35 = arith.constant 0.000000e+00 : f32
    %48 = vector.broadcast %cst_35 : f32 to vector<256x128xf32>
    %49 = arith.maximumf %47, %48 : vector<256x128xf32>
    %50 = arith.truncf %49 : vector<256x128xf32> to vector<256x128xbf16>
    %c0_36 = arith.constant 0 : index
    %c0_37 = arith.constant 0 : index
    %51 = vector.load %arg13[%c0_36, %c0_37] : memref<128x128xbf16, #tpu.memory_space<vmem>>, vector<128x128xbf16>
    %cst_38 = arith.constant dense<0.000000e+00> : vector<256x128xf32>
    %52 = tpu.matmul %50, %51, %cst_38 {dimension_numbers = #tpu.dot_dimension_numbers<[1], [0], [0], [1], [0, 0, 1, 1], [], []>} : vector<256x128xbf16>, vector<128x128xbf16>, vector<256x128xf32> -> vector<256x128xf32>
    %c0_39 = arith.constant 0 : index
    %c0_40 = arith.constant 0 : index
    %53 = vector.load %arg14[%c0_39, %c0_40] : memref<1x128xf32, #tpu.memory_space<vmem>>, vector<1x128xf32>
    %54 = vector.broadcast %53 : vector<1x128xf32> to vector<256x128xf32>
    %55 = arith.addf %52, %54 : vector<256x128xf32>
    %56 = arith.truncf %55 : vector<256x128xf32> to vector<256x128xbf16>
    %c0_41 = arith.constant 0 : index
    %c0_42 = arith.constant 0 : index
    %c0_43 = arith.constant 0 : index
    %57 = vector.load %arg15[%c0_41, %c0_42, %c0_43] : memref<1x256x128xbf16, #tpu.memory_space<vmem>>, vector<1x256x128xbf16>
    %58 = vector.shape_cast %57 : vector<1x256x128xbf16> to vector<256x128xbf16>
    %59 = vector.shape_cast %56 : vector<256x128xbf16> to vector<1x256x128xbf16>
    tpu.vector_store %arg15[%c0_41, %c0_42, %c0_43], %59 {strides = array<i32>} : memref<1x256x128xbf16, #tpu.memory_space<vmem>>, vector<1x256x128xbf16>,
    return
  }
  func.func @transform_0(%arg0: i32) -> (i32, i32, i32) {
    %c0_i32 = arith.constant 0 : i32
    %c0_i32_0 = arith.constant 0 : i32
    %c0_i32_1 = arith.constant 0 : i32
    return %arg0, %c0_i32, %c0_i32_0 : i32, i32, i32
  }
  func.func @transform_1(%arg0: i32) -> (i32, i32, i32) {
    %c0_i32 = arith.constant 0 : i32
    %c0_i32_0 = arith.constant 0 : i32
    %c0_i32_1 = arith.constant 0 : i32
    return %arg0, %c0_i32, %c0_i32_0 : i32, i32, i32
  }
  func.func @transform_2(%arg0: i32) -> (i32, i32) {
    %c0_i32 = arith.constant 0 : i32
    %c0_i32_0 = arith.constant 0 : i32
    %c0_i32_1 = arith.constant 0 : i32
    return %c0_i32, %c0_i32_0 : i32, i32
  }
  func.func @transform_3(%arg0: i32) -> (i32, i32) {
    %c0_i32 = arith.constant 0 : i32
    %c0_i32_0 = arith.constant 0 : i32
    %c0_i32_1 = arith.constant 0 : i32
    return %c0_i32, %c0_i32_0 : i32, i32
  }
  func.func @transform_4(%arg0: i32) -> (i32, i32) {
    %c0_i32 = arith.constant 0 : i32
    %c0_i32_0 = arith.constant 0 : i32
    %c0_i32_1 = arith.constant 0 : i32
    return %c0_i32, %c0_i32_0 : i32, i32
  }
  func.func @transform_5(%arg0: i32) -> (i32, i32) {
    %c0_i32 = arith.constant 0 : i32
    %c0_i32_0 = arith.constant 0 : i32
    %c0_i32_1 = arith.constant 0 : i32
    return %c0_i32, %c0_i32_0 : i32, i32
  }
  func.func @transform_6(%arg0: i32) -> (i32, i32) {
    %c0_i32 = arith.constant 0 : i32
    %c0_i32_0 = arith.constant 0 : i32
    %c0_i32_1 = arith.constant 0 : i32
    return %c0_i32, %c0_i32_0 : i32, i32
  }
  func.func @transform_7(%arg0: i32) -> (i32, i32) {
    %c0_i32 = arith.constant 0 : i32
    %c0_i32_0 = arith.constant 0 : i32
    %c0_i32_1 = arith.constant 0 : i32
    return %c0_i32, %c0_i32_0 : i32, i32
  }
  func.func @transform_8(%arg0: i32) -> (i32, i32) {
    %c0_i32 = arith.constant 0 : i32
    %c0_i32_0 = arith.constant 0 : i32
    %c0_i32_1 = arith.constant 0 : i32
    return %c0_i32, %c0_i32_0 : i32, i32
  }
  func.func @transform_9(%arg0: i32) -> (i32, i32) {
    %c0_i32 = arith.constant 0 : i32
    %c0_i32_0 = arith.constant 0 : i32
    %c0_i32_1 = arith.constant 0 : i32
    return %c0_i32, %c0_i32_0 : i32, i32
  }
  func.func @transform_10(%arg0: i32) -> (i32, i32) {
    %c0_i32 = arith.constant 0 : i32
    %c0_i32_0 = arith.constant 0 : i32
    %c0_i32_1 = arith.constant 0 : i32
    return %c0_i32, %c0_i32_0 : i32, i32
  }
  func.func @transform_11(%arg0: i32) -> (i32, i32) {
    %c0_i32 = arith.constant 0 : i32
    %c0_i32_0 = arith.constant 0 : i32
    %c0_i32_1 = arith.constant 0 : i32
    return %c0_i32, %c0_i32_0 : i32, i32
  }
  func.func @transform_12(%arg0: i32) -> (i32, i32) {
    %c0_i32 = arith.constant 0 : i32
    %c0_i32_0 = arith.constant 0 : i32
    %c0_i32_1 = arith.constant 0 : i32
    return %c0_i32, %c0_i32_0 : i32, i32
  }
  func.func @transform_13(%arg0: i32) -> (i32, i32) {
    %c0_i32 = arith.constant 0 : i32
    %c0_i32_0 = arith.constant 0 : i32
    %c0_i32_1 = arith.constant 0 : i32
    return %c0_i32, %c0_i32_0 : i32, i32
  }
  func.func @transform_14(%arg0: i32) -> (i32, i32, i32) {
    %c0_i32 = arith.constant 0 : i32
    %c0_i32_0 = arith.constant 0 : i32
    %c0_i32_1 = arith.constant 0 : i32
    return %arg0, %c0_i32, %c0_i32_0 : i32, i32, i32
  }
}

</mosaic_0001>

<llo_original>
// kernel: tpu_custom_call.1
$region0: #{tpu_custom_call.1}
  #allocation0 [shape = 'u32[]', space=smem, size = 0x4, offset = 0x4, fixed_abs, tag = 'smem constant byte address 0x4 - core index']
  #allocation1 [shape = 'u32[72,128]{1,0:T(1,128)}', space=vmem, size = 0x9000, scoped, tag = 'internal scratch']
  %s0 = inlined_call_operand.hbm [shape: bf16[4,256,256], index: 0, kind: input, shape index: {}]
  %s1 = inlined_call_operand.hbm [shape: bf16[4,256,128], index: 1, kind: input, shape index: {}]
  %s2 = inlined_call_operand.hbm [shape: bf16[128,128], index: 2, kind: input, shape index: {}]
  %s3 = inlined_call_operand.vmem [shape: f32[1,128], index: 3, kind: input, shape index: {}]
  %s4 = inlined_call_operand.hbm [shape: bf16[128,128], index: 4, kind: input, shape index: {}]
  %s5 = inlined_call_operand.vmem [shape: f32[1,128], index: 5, kind: input, shape index: {}]
  %s6 = inlined_call_operand.hbm [shape: bf16[128,128], index: 6, kind: input, shape index: {}]
  %s7 = inlined_call_operand.vmem [shape: f32[1,128], index: 7, kind: input, shape index: {}]
  %s8 = inlined_call_operand.hbm [shape: bf16[128,128], index: 8, kind: input, shape index: {}]
  %s9 = inlined_call_operand.vmem [shape: f32[1,128], index: 9, kind: input, shape index: {}]
  %s10 = inlined_call_operand.hbm [shape: bf16[128,128], index: 10, kind: input, shape index: {}]
  %s11 = inlined_call_operand.vmem [shape: f32[1,128], index: 11, kind: input, shape index: {}]
  %s12 = inlined_call_operand.hbm [shape: bf16[128,128], index: 12, kind: input, shape index: {}]
  %s13 = inlined_call_operand.vmem [shape: f32[1,128], index: 13, kind: input, shape index: {}]
  %s14 = inlined_call_operand.hbm [shape: bf16[4,256,128], index: 14, kind: output, shape index: {}]
  %s15 = sld [smem:[#allocation0]]
  $region121: #{tpu_custom_call.1} parent=0
    _
  %s17 = ssub.s32 1, %s15
  %s18 = scalar_select 0, %s17, %s15
  $region1: #{tpu_custom_call.1} parent=0
    #allocation2 [shape = 'u8[262144]{0}', space=vmem, size = 0x40000, scoped, tag = 'input window, operand 0']
    #allocation3 [shape = 's32[2]{0}', space=sflag, size = 0x8, scoped, tag = 'scoped memory for tpu_custom_call.1']
    #allocation4 [shape = 's32[2]{0}', space=sflag, size = 0x8, scoped, tag = 'scoped memory for tpu_custom_call.1']
    #allocation5 [shape = 'u8[131072]{0}', space=vmem, size = 0x20000, scoped, tag = 'input window, operand 1']
    #allocation6 [shape = 's32[2]{0}', space=sflag, size = 0x8, scoped, tag = 'scoped memory for tpu_custom_call.1']
    #allocation7 [shape = 'u8[32768]{0}', space=vmem, size = 0x8000, scoped, tag = 'input window, operand 2, single buffered']
    #allocation8 [shape = 'u8[32768]{0}', space=vmem, size = 0x8000, scoped, tag = 'input window, operand 4, single buffered']
    #allocation9 [shape = 's32[1]{0}', space=sflag, size = 0x4, scoped, tag = 'scoped memory for tpu_custom_call.1']
    #allocation10 [shape = 'u8[32768]{0}', space=vmem, size = 0x8000, scoped, tag = 'input window, operand 6, single buffered']
    #allocation11 [shape = 'u8[32768]{0}', space=vmem, size = 0x8000, scoped, tag = 'input window, operand 8, single buffered']
    #allocation12 [shape = 's32[1]{0}', space=sflag, size = 0x4, scoped, tag = 'scoped memory for tpu_custom_call.1']
    #allocation13 [shape = 'u8[32768]{0}', space=vmem, size = 0x8000, scoped, tag = 'input window, operand 10, single buffered']
    #allocation14 [shape = 'u8[32768]{0}', space=vmem, size = 0x8000, scoped, tag = 'input window, operand 12, single buffered']
    #allocation15 [shape = 's32[1]{0}', space=sflag, size = 0x4, scoped, tag = 'scoped memory for tpu_custom_call.1']
    #allocation16 [shape = 'u8[131072]{0}', space=vmem, size = 0x20000, scoped, tag = 'output window, operand 0']
    %19 = vsyncpa [#allocation3], 0
    %s20 = scalar_lea.sflag [#allocation3], 1
    %21 = vsyncpa %s20, 0
    %22 = vsyncpa [#allocation6], 0
    %s23 = scalar_lea.sflag [#allocation6], 1
    %24 = vsyncpa %s23, 0
    %25 = vsyncpa [#allocation9], 0
    %26 = vsyncpa [#allocation12], 0
    %27 = vsyncpa [#allocation15], 0
    %28 = vsyncpa [#allocation4], 0
    %s29 = scalar_lea.sflag [#allocation4], 1
    %30 = vsyncpa %s29, 0
    loop: start=0, step=1, limit=6
    $region2: #{tpu_custom_call.1} parent=1 // loop_pre_header
      _
    $region3: #{tpu_custom_call.1} parent=1 // loop_header
      %s32 = sphi 0, %s36
      %p33 = scmp.ge.s32.totalorder %s32, 6
      %s42 = sphi 0, %s44
      %s45 = sphi 0, %s42
      %s46 = sphi 0, %s45
      %s62 = sphi 0, %s46
      %s68 = sphi 0, %s70
      %s71 = sphi 0, %s68
      %s72 = sphi 0, %s71
      %s88 = sphi 0, %s72
      %s92 = sphi 0, %s92
      %s94 = sphi 0, %s92
      %s95 = sphi 0, %s94
      %s109 = sphi 0, %s95
      %s113 = sphi 0, %s113
      %s115 = sphi 0, %s113
      %s116 = sphi 0, %s115
      %s130 = sphi 0, %s116
      %s134 = sphi 0, %s134
      %s136 = sphi 0, %s134
      %s137 = sphi 0, %s136
      %s151 = sphi 0, %s137
      %s155 = sphi 0, %s155
      %s157 = sphi 0, %s155
      %s158 = sphi 0, %s157
      %s172 = sphi 0, %s158
      %s176 = sphi 0, %s176
      %s178 = sphi 0, %s176
      %s179 = sphi 0, %s178
      %s193 = sphi 0, %s179
      %s197 = sphi 0, %s197
      %s199 = sphi 0, %s197
      %s200 = sphi 0, %s199
      %s214 = sphi 0, %s200
      %s218 = sphi 0, %s218
      %s220 = sphi 0, %s218
      %s221 = sphi 0, %s220
      %s235 = sphi 0, %s221
      %s239 = sphi 0, %s239
      %s241 = sphi 0, %s239
      %s242 = sphi 0, %s241
      %s256 = sphi 0, %s242
      %s260 = sphi 0, %s260
      %s262 = sphi 0, %s260
      %s263 = sphi 0, %s262
      %s277 = sphi 0, %s263
      %s281 = sphi 0, %s281
      %s283 = sphi 0, %s281
      %s284 = sphi 0, %s283
      %s298 = sphi 0, %s284
      %s302 = sphi 0, %s302
      %s304 = sphi 0, %s302
      %s305 = sphi 0, %s304
      %s319 = sphi 0, %s305
      %s323 = sphi 0, %s323
      %s325 = sphi 0, %s323
      %s326 = sphi 0, %s325
      %s340 = sphi 0, %s326
      %s346 = sphi 0, %s348
      %s349 = sphi 0, %s346
      %s350 = sphi 0, %s349
      %s366 = sphi 0, %s350
    $region4: #{tpu_custom_call.1} parent=1 // loop_header_branch
      %35 = sbr.rel (%p33) target = $region8
    $region5: #{tpu_custom_call.1} parent=1 // loop_body
      %s37 = ssub.s32 %s32, 1
      %s38 = ssub.s32 %s32, 2
      %s39 = sadd.s32 %s32, 1
      %s40 = ssub.s32 %s32, %s39
      %p41 = scmp.eq.s32.totalorder %s40, 0
      %s43 = sadd.s32 %s42, 1
      %s44 = scalar_select %p41, %s42, %s43
      %p47 = pneg %p41
      %p48 = scmp.eq.s32.totalorder %s32, 3
      %p49 = por %p47, %p48
      %p50 = scmp.ne.s32.totalorder %s42, %s45
      %p51 = scmp.eq.s32.totalorder %s32, 0
      %p52 = por %p50, %p51
      %p53 = scmp.ne.s32.totalorder %s42, %s45
      %p54 = scmp.eq.s32.totalorder %s37, 3
      %p55 = por %p53, %p54
      %p56 = scmp.ne.s32.totalorder %s45, %s46
      %p57 = scmp.eq.s32.totalorder %s37, 0
      %p58 = por %p56, %p57
      %p59 = scmp.ne.s32.totalorder %s45, %s46
      %p60 = scmp.eq.s32.totalorder %s38, 3
      %p61 = por %p59, %p60
      %p63 = scmp.ne.s32.totalorder %s46, %s62
      %p64 = scmp.eq.s32.totalorder %s38, 0
      %p65 = por %p63, %p64
      %s66 = ssub.s32 %s32, %s39
      %p67 = scmp.eq.s32.totalorder %s66, 0
      %s69 = sadd.s32 %s68, 1
      %s70 = scalar_select %p67, %s68, %s69
      %p73 = pneg %p67
      %p74 = scmp.eq.s32.totalorder %s32, 3
      %p75 = por %p73, %p74
      %p76 = scmp.ne.s32.totalorder %s68, %s71
      %p77 = scmp.eq.s32.totalorder %s32, 0
      %p78 = por %p76, %p77
      %p79 = scmp.ne.s32.totalorder %s68, %s71
      %p80 = scmp.eq.s32.totalorder %s37, 3
      %p81 = por %p79, %p80
      %p82 = scmp.ne.s32.totalorder %s71, %s72
      %p83 = scmp.eq.s32.totalorder %s37, 0
      %p84 = por %p82, %p83
      %p85 = scmp.ne.s32.totalorder %s71, %s72
      %p86 = scmp.eq.s32.totalorder %s38, 3
      %p87 = por %p85, %p86
      %p89 = scmp.ne.s32.totalorder %s72, %s88
      %p90 = scmp.eq.s32.totalorder %s38, 0
      %p91 = por %p89, %p90
      %s93 = sadd.s32 %s92, 1
      %p96 = scmp.eq.s32.totalorder %s32, 3
      %p97 = scmp.ne.s32.totalorder %s92, %s94
      %p98 = scmp.eq.s32.totalorder %s32, 0
      %p99 = por %p97, %p98
      %p100 = scmp.ne.s32.totalorder %s92, %s94
      %p101 = scmp.eq.s32.totalorder %s37, 3
      %p102 = por %p100, %p101
      %p103 = scmp.ne.s32.totalorder %s94, %s95
      %p104 = scmp.eq.s32.totalorder %s37, 0
      %p105 = por %p103, %p104
      %p106 = scmp.ne.s32.totalorder %s94, %s95
      %p107 = scmp.eq.s32.totalorder %s38, 3
      %p108 = por %p106, %p107
      %p110 = scmp.ne.s32.totalorder %s95, %s109
      %p111 = scmp.eq.s32.totalorder %s38, 0
      %p112 = por %p110, %p111
      %s114 = sadd.s32 %s113, 1
      %p117 = scmp.eq.s32.totalorder %s32, 3
      %p118 = scmp.ne.s32.totalorder %s113, %s115
      %p119 = scmp.eq.s32.totalorder %s32, 0
      %p120 = por %p118, %p119
      %p121 = scmp.ne.s32.totalorder %s113, %s115
      %p122 = scmp.eq.s32.totalorder %s37, 3
      %p123 = por %p121, %p122
      %p124 = scmp.ne.s32.totalorder %s115, %s116
      %p125 = scmp.eq.s32.totalorder %s37, 0
      %p126 = por %p124, %p125
      %p127 = scmp.ne.s32.totalorder %s115, %s116
      %p128 = scmp.eq.s32.totalorder %s38, 3
      %p129 = por %p127, %p128
      %p131 = scmp.ne.s32.totalorder %s116, %s130
      %p132 = scmp.eq.s32.totalorder %s38, 0
      %p133 = por %p131, %p132
      %s135 = sadd.s32 %s134, 1
      %p138 = scmp.eq.s32.totalorder %s32, 3
      %p139 = scmp.ne.s32.totalorder %s134, %s136
      %p140 = scmp.eq.s32.totalorder %s32, 0
      %p141 = por %p139, %p140
      %p142 = scmp.ne.s32.totalorder %s134, %s136
      %p143 = scmp.eq.s32.totalorder %s37, 3
      %p144 = por %p142, %p143
      %p145 = scmp.ne.s32.totalorder %s136, %s137
      %p146 = scmp.eq.s32.totalorder %s37, 0
      %p147 = por %p145, %p146
      %p148 = scmp.ne.s32.totalorder %s136, %s137
      %p149 = scmp.eq.s32.totalorder %s38, 3
      %p150 = por %p148, %p149
      %p152 = scmp.ne.s32.totalorder %s137, %s151
      %p153 = scmp.eq.s32.totalorder %s38, 0
      %p154 = por %p152, %p153
      %s156 = sadd.s32 %s155, 1
      %p159 = scmp.eq.s32.totalorder %s32, 3
      %p160 = scmp.ne.s32.totalorder %s155, %s157
      %p161 = scmp.eq.s32.totalorder %s32, 0
      %p162 = por %p160, %p161
      %p163 = scmp.ne.s32.totalorder %s155, %s157
      %p164 = scmp.eq.s32.totalorder %s37, 3
      %p165 = por %p163, %p164
      %p166 = scmp.ne.s32.totalorder %s157, %s158
      %p167 = scmp.eq.s32.totalorder %s37, 0
      %p168 = por %p166, %p167
      %p169 = scmp.ne.s32.totalorder %s157, %s158
      %p170 = scmp.eq.s32.totalorder %s38, 3
      %p171 = por %p169, %p170
      %p173 = scmp.ne.s32.totalorder %s158, %s172
      %p174 = scmp.eq.s32.totalorder %s38, 0
      %p175 = por %p173, %p174
      %s177 = sadd.s32 %s176, 1
      %p180 = scmp.eq.s32.totalorder %s32, 3
      %p181 = scmp.ne.s32.totalorder %s176, %s178
      %p182 = scmp.eq.s32.totalorder %s32, 0
      %p183 = por %p181, %p182
      %p184 = scmp.ne.s32.totalorder %s176, %s178
      %p185 = scmp.eq.s32.totalorder %s37, 3
      %p186 = por %p184, %p185
      %p187 = scmp.ne.s32.totalorder %s178, %s179
      %p188 = scmp.eq.s32.totalorder %s37, 0
      %p189 = por %p187, %p188
      %p190 = scmp.ne.s32.totalorder %s178, %s179
      %p191 = scmp.eq.s32.totalorder %s38, 3
      %p192 = por %p190, %p191
      %p194 = scmp.ne.s32.totalorder %s179, %s193
      %p195 = scmp.eq.s32.totalorder %s38, 0
      %p196 = por %p194, %p195
      %s198 = sadd.s32 %s197, 1
      %p201 = scmp.eq.s32.totalorder %s32, 3
      %p202 = scmp.ne.s32.totalorder %s197, %s199
      %p203 = scmp.eq.s32.totalorder %s32, 0
      %p204 = por %p202, %p203
      %p205 = scmp.ne.s32.totalorder %s197, %s199
      %p206 = scmp.eq.s32.totalorder %s37, 3
      %p207 = por %p205, %p206
      %p208 = scmp.ne.s32.totalorder %s199, %s200
      %p209 = scmp.eq.s32.totalorder %s37, 0
      %p210 = por %p208, %p209
      %p211 = scmp.ne.s32.totalorder %s199, %s200
      %p212 = scmp.eq.s32.totalorder %s38, 3
      %p213 = por %p211, %p212
      %p215 = scmp.ne.s32.totalorder %s200, %s214
      %p216 = scmp.eq.s32.totalorder %s38, 0
      %p217 = por %p215, %p216
      %s219 = sadd.s32 %s218, 1
      %p222 = scmp.eq.s32.totalorder %s32, 3
      %p223 = scmp.ne.s32.totalorder %s218, %s220
      %p224 = scmp.eq.s32.totalorder %s32, 0
      %p225 = por %p223, %p224
      %p226 = scmp.ne.s32.totalorder %s218, %s220
      %p227 = scmp.eq.s32.totalorder %s37, 3
      %p228 = por %p226, %p227
      %p229 = scmp.ne.s32.totalorder %s220, %s221
      %p230 = scmp.eq.s32.totalorder %s37, 0
      %p231 = por %p229, %p230
      %p232 = scmp.ne.s32.totalorder %s220, %s221
      %p233 = scmp.eq.s32.totalorder %s38, 3
      %p234 = por %p232, %p233
      %p236 = scmp.ne.s32.totalorder %s221, %s235
      %p237 = scmp.eq.s32.totalorder %s38, 0
      %p238 = por %p236, %p237
      %s240 = sadd.s32 %s239, 1
      %p243 = scmp.eq.s32.totalorder %s32, 3
      %p244 = scmp.ne.s32.totalorder %s239, %s241
      %p245 = scmp.eq.s32.totalorder %s32, 0
      %p246 = por %p244, %p245
      %p247 = scmp.ne.s32.totalorder %s239, %s241
      %p248 = scmp.eq.s32.totalorder %s37, 3
      %p249 = por %p247, %p248
      %p250 = scmp.ne.s32.totalorder %s241, %s242
      %p251 = scmp.eq.s32.totalorder %s37, 0
      %p252 = por %p250, %p251
      %p253 = scmp.ne.s32.totalorder %s241, %s242
      %p254 = scmp.eq.s32.totalorder %s38, 3
      %p255 = por %p253, %p254
      %p257 = scmp.ne.s32.totalorder %s242, %s256
      %p258 = scmp.eq.s32.totalorder %s38, 0
      %p259 = por %p257, %p258
      %s261 = sadd.s32 %s260, 1
      %p264 = scmp.eq.s32.totalorder %s32, 3
      %p265 = scmp.ne.s32.totalorder %s260, %s262
      %p266 = scmp.eq.s32.totalorder %s32, 0
      %p267 = por %p265, %p266
      %p268 = scmp.ne.s32.totalorder %s260, %s262
      %p269 = scmp.eq.s32.totalorder %s37, 3
      %p270 = por %p268, %p269
      %p271 = scmp.ne.s32.totalorder %s262, %s263
      %p272 = scmp.eq.s32.totalorder %s37, 0
      %p273 = por %p271, %p272
      %p274 = scmp.ne.s32.totalorder %s262, %s263
      %p275 = scmp.eq.s32.totalorder %s38, 3
      %p276 = por %p274, %p275
      %p278 = scmp.ne.s32.totalorder %s263, %s277
      %p279 = scmp.eq.s32.totalorder %s38, 0
      %p280 = por %p278, %p279
      %s282 = sadd.s32 %s281, 1
      %p285 = scmp.eq.s32.totalorder %s32, 3
      %p286 = scmp.ne.s32.totalorder %s281, %s283
      %p287 = scmp.eq.s32.totalorder %s32, 0
      %p288 = por %p286, %p287
      %p289 = scmp.ne.s32.totalorder %s281, %s283
      %p290 = scmp.eq.s32.totalorder %s37, 3
      %p291 = por %p289, %p290
      %p292 = scmp.ne.s32.totalorder %s283, %s284
      %p293 = scmp.eq.s32.totalorder %s37, 0
      %p294 = por %p292, %p293
      %p295 = scmp.ne.s32.totalorder %s283, %s284
      %p296 = scmp.eq.s32.totalorder %s38, 3
      %p297 = por %p295, %p296
      %p299 = scmp.ne.s32.totalorder %s284, %s298
      %p300 = scmp.eq.s32.totalorder %s38, 0
      %p301 = por %p299, %p300
      %s303 = sadd.s32 %s302, 1
      %p306 = scmp.eq.s32.totalorder %s32, 3
      %p307 = scmp.ne.s32.totalorder %s302, %s304
      %p308 = scmp.eq.s32.totalorder %s32, 0
      %p309 = por %p307, %p308
      %p310 = scmp.ne.s32.totalorder %s302, %s304
      %p311 = scmp.eq.s32.totalorder %s37, 3
      %p312 = por %p310, %p311
      %p313 = scmp.ne.s32.totalorder %s304, %s305
      %p314 = scmp.eq.s32.totalorder %s37, 0
      %p315 = por %p313, %p314
      %p316 = scmp.ne.s32.totalorder %s304, %s305
      %p317 = scmp.eq.s32.totalorder %s38, 3
      %p318 = por %p316, %p317
      %p320 = scmp.ne.s32.totalorder %s305, %s319
      %p321 = scmp.eq.s32.totalorder %s38, 0
      %p322 = por %p320, %p321
      %s324 = sadd.s32 %s323, 1
      %p327 = scmp.eq.s32.totalorder %s32, 3
      %p328 = scmp.ne.s32.totalorder %s323, %s325
      %p329 = scmp.eq.s32.totalorder %s32, 0
      %p330 = por %p328, %p329
      %p331 = scmp.ne.s32.totalorder %s323, %s325
      %p332 = scmp.eq.s32.totalorder %s37, 3
      %p333 = por %p331, %p332
      %p334 = scmp.ne.s32.totalorder %s325, %s326
      %p335 = scmp.eq.s32.totalorder %s37, 0
      %p336 = por %p334, %p335
      %p337 = scmp.ne.s32.totalorder %s325, %s326
      %p338 = scmp.eq.s32.totalorder %s38, 3
      %p339 = por %p337, %p338
      %p341 = scmp.ne.s32.totalorder %s326, %s340
      %p342 = scmp.eq.s32.totalorder %s38, 0
      %p343 = por %p341, %p342
      %s344 = ssub.s32 %s32, %s39
      %p345 = scmp.eq.s32.totalorder %s344, 0
      %s347 = sadd.s32 %s346, 1
      %s348 = scalar_select %p345, %s346, %s347
      %p351 = pneg %p345
      %p352 = scmp.eq.s32.totalorder %s32, 3
      %p353 = por %p351, %p352
      %p354 = scmp.ne.s32.totalorder %s346, %s349
      %p355 = scmp.eq.s32.totalorder %s32, 0
      %p356 = por %p354, %p355
      %p357 = scmp.ne.s32.totalorder %s346, %s349
      %p358 = scmp.eq.s32.totalorder %s37, 3
      %p359 = por %p357, %p358
      %p360 = scmp.ne.s32.totalorder %s349, %s350
      %p361 = scmp.eq.s32.totalorder %s37, 0
      %p362 = por %p360, %p361
      %p363 = scmp.ne.s32.totalorder %s349, %s350
      %p364 = scmp.eq.s32.totalorder %s38, 3
      %p365 = por %p363, %p364
      %p367 = scmp.ne.s32.totalorder %s350, %s366
      %p368 = scmp.eq.s32.totalorder %s38, 0
      %p369 = por %p367, %p368
      %p370 = scmp.le.s32.totalorder 1, %s32
      %p371 = scmp.lt.s32.totalorder %s32, 5
      %p372 = pnand %p370, %p371
      %p373 = pneg %p372
      // Predicated region
      $region9: #{tpu_custom_call.1} parent=5 // pred_check
        _
      $region10: #{tpu_custom_call.1} parent=5 // pred_check_branch
        %375 = sbr.rel (%p372) target = $region12
      $region11: #{tpu_custom_call.1} parent=5 // pred_region
        %s376 = ssub.s32 %s32, 1
        // Predicated region
        $region13: #{tpu_custom_call.1} parent=11 // pred_check
          %p377 = pneg %p105
        $region14: #{tpu_custom_call.1} parent=11 // pred_check_branch
          %379 = sbr.rel (%p377) target = $region16
        $region15: #{tpu_custom_call.1} parent=11 // pred_region
          %381 = vsyncadd [#allocation6], 0
          %s382 = sshll.u32 %s2, 4
          %s383 = int_to_ptr.hbm [resolvable:$true] %s382
          %s384 = sshll.u32 [#allocation7], 4
          %s385 = int_to_ptr.vmem [resolvable:$true] %s384
          %390 = dma.hbm_to_vmem [thread:$0]  %s383, 1024, %s385, [#allocation6], 64, 64, 4
        $region16: #{tpu_custom_call.1} parent=11 // pred_fallthru
          _
        // Predicated region
        $region17: #{tpu_custom_call.1} parent=11 // pred_check
          %p391 = pneg %p126
        $region18: #{tpu_custom_call.1} parent=11 // pred_check_branch
          %393 = sbr.rel (%p391) target = $region20
        $region19: #{tpu_custom_call.1} parent=11 // pred_region
          _
        $region20: #{tpu_custom_call.1} parent=11 // pred_fallthru
          _
        // Predicated region
        $region21: #{tpu_custom_call.1} parent=11 // pred_check
          %p394 = pneg %p147
        $region22: #{tpu_custom_call.1} parent=11 // pred_check_branch
          %396 = sbr.rel (%p394) target = $region24
        $region23: #{tpu_custom_call.1} parent=11 // pred_region
          %398 = vsyncadd [#allocation9], 0
          %s399 = sshll.u32 %s4, 4
          %s400 = int_to_ptr.hbm [resolvable:$true] %s399
          %s401 = sshll.u32 [#allocation8], 4
          %s402 = int_to_ptr.vmem [resolvable:$true] %s401
          %407 = dma.hbm_to_vmem [thread:$0]  %s400, 1024, %s402, [#allocation9], 64, 64, 4
        $region24: #{tpu_custom_call.1} parent=11 // pred_fallthru
          _
        // Predicated region
        $region25: #{tpu_custom_call.1} parent=11 // pred_check
          %p408 = pneg %p168
        $region26: #{tpu_custom_call.1} parent=11 // pred_check_branch
          %410 = sbr.rel (%p408) target = $region28
        $region27: #{tpu_custom_call.1} parent=11 // pred_region
          _
        $region28: #{tpu_custom_call.1} parent=11 // pred_fallthru
          _
        // Predicated region
        $region29: #{tpu_custom_call.1} parent=11 // pred_check
          %p411 = pneg %p189
        $region30: #{tpu_custom_call.1} parent=11 // pred_check_branch
          %413 = sbr.rel (%p411) target = $region32
        $region31: #{tpu_custom_call.1} parent=11 // pred_region
          %415 = vsyncadd [#allocation9], 0
          %s416 = sshll.u32 %s6, 4
          %s417 = int_to_ptr.hbm [resolvable:$true] %s416
          %s418 = sshll.u32 [#allocation10], 4
          %s419 = int_to_ptr.vmem [resolvable:$true] %s418
          %424 = dma.hbm_to_vmem [thread:$0]  %s417, 1024, %s419, [#allocation9], 64, 64, 4
        $region32: #{tpu_custom_call.1} parent=11 // pred_fallthru
          _
        // Predicated region
        $region33: #{tpu_custom_call.1} parent=11 // pred_check
          %p425 = pneg %p210
        $region34: #{tpu_custom_call.1} parent=11 // pred_check_branch
          %427 = sbr.rel (%p425) target = $region36
        $region35: #{tpu_custom_call.1} parent=11 // pred_region
          _
        $region36: #{tpu_custom_call.1} parent=11 // pred_fallthru
          _
        // Predicated region
        $region37: #{tpu_custom_call.1} parent=11 // pred_check
          %p428 = pneg %p231
        $region38: #{tpu_custom_call.1} parent=11 // pred_check_branch
          %430 = sbr.rel (%p428) target = $region40
        $region39: #{tpu_custom_call.1} parent=11 // pred_region
          %432 = vsyncadd [#allocation12], 0
          %s433 = sshll.u32 %s8, 4
          %s434 = int_to_ptr.hbm [resolvable:$true] %s433
          %s435 = sshll.u32 [#allocation11], 4
          %s436 = int_to_ptr.vmem [resolvable:$true] %s435
          %441 = dma.hbm_to_vmem [thread:$0]  %s434, 1024, %s436, [#allocation12], 64, 64, 4
        $region40: #{tpu_custom_call.1} parent=11 // pred_fallthru
          _
        // Predicated region
        $region41: #{tpu_custom_call.1} parent=11 // pred_check
          %p442 = pneg %p252
        $region42: #{tpu_custom_call.1} parent=11 // pred_check_branch
          %444 = sbr.rel (%p442) target = $region44
        $region43: #{tpu_custom_call.1} parent=11 // pred_region
          _
        $region44: #{tpu_custom_call.1} parent=11 // pred_fallthru
          _
        // Predicated region
        $region45: #{tpu_custom_call.1} parent=11 // pred_check
          %p445 = pneg %p273
        $region46: #{tpu_custom_call.1} parent=11 // pred_check_branch
          %447 = sbr.rel (%p445) target = $region48
        $region47: #{tpu_custom_call.1} parent=11 // pred_region
          %449 = vsyncadd [#allocation12], 0
          %s450 = sshll.u32 %s10, 4
          %s451 = int_to_ptr.hbm [resolvable:$true] %s450
          %s452 = sshll.u32 [#allocation13], 4
          %s453 = int_to_ptr.vmem [resolvable:$true] %s452
          %458 = dma.hbm_to_vmem [thread:$0]  %s451, 1024, %s453, [#allocation12], 64, 64, 4
        $region48: #{tpu_custom_call.1} parent=11 // pred_fallthru
          _
        // Predicated region
        $region49: #{tpu_custom_call.1} parent=11 // pred_check
          %p459 = pneg %p294
        $region50: #{tpu_custom_call.1} parent=11 // pred_check_branch
          %461 = sbr.rel (%p459) target = $region52
        $region51: #{tpu_custom_call.1} parent=11 // pred_region
          _
        $region52: #{tpu_custom_call.1} parent=11 // pred_fallthru
          _
        // Predicated region
        $region53: #{tpu_custom_call.1} parent=11 // pred_check
          %p462 = pneg %p315
        $region54: #{tpu_custom_call.1} parent=11 // pred_check_branch
          %464 = sbr.rel (%p462) target = $region56
        $region55: #{tpu_custom_call.1} parent=11 // pred_region
          %466 = vsyncadd [#allocation15], 0
          %s467 = sshll.u32 %s12, 4
          %s468 = int_to_ptr.hbm [resolvable:$true] %s467
          %s469 = sshll.u32 [#allocation14], 4
          %s470 = int_to_ptr.vmem [resolvable:$true] %s469
          %475 = dma.hbm_to_vmem [thread:$0]  %s468, 1024, %s470, [#allocation15], 64, 64, 4
        $region56: #{tpu_custom_call.1} parent=11 // pred_fallthru
          _
        // Predicated region
        $region57: #{tpu_custom_call.1} parent=11 // pred_check
          %p476 = pneg %p336
        $region58: #{tpu_custom_call.1} parent=11 // pred_check_branch
          %478 = sbr.rel (%p476) target = $region60
        $region59: #{tpu_custom_call.1} parent=11 // pred_region
          _
        $region60: #{tpu_custom_call.1} parent=11 // pred_fallthru
          _
      $region12: #{tpu_custom_call.1} parent=5 // pred_fallthru
        _
      %p479 = scmp.lt.s32.totalorder %s32, 4
      // Predicated region
      $region61: #{tpu_custom_call.1} parent=5 // pred_check
        %p480 = pneg %p479
      $region62: #{tpu_custom_call.1} parent=5 // pred_check_branch
        %482 = sbr.rel (%p480) target = $region64
      $region63: #{tpu_custom_call.1} parent=5 // pred_region
        // Predicated region
        $region65: #{tpu_custom_call.1} parent=63 // pred_check
          %p483 = pneg %p52
        $region66: #{tpu_custom_call.1} parent=63 // pred_check_branch
          %485 = sbr.rel (%p483) target = $region68
        $region67: #{tpu_custom_call.1} parent=63 // pred_region
          %s486 = sand.u32 %s42, 1
          %s487 = scalar_lea.sflag [#allocation3], %s486
          %s488 = sand.u32 %s42, 1
          %s489 = smul.addr %s488, 256
          %s490 = scalar_lea.vmem [#allocation2], %s489
          %492 = vsyncadd %s487, 0
          %s493 = smul.addr %s32, 64
          %s494 = smul.addr %s493, 4
          %s495 = scalar_lea.hbm %s0, %s494
          %s496 = sshll.u32 %s495, 4
          %s497 = int_to_ptr.hbm [resolvable:$true] %s496
          %s498 = sshll.u32 %s490, 4
          %s499 = int_to_ptr.vmem [resolvable:$true] %s498
          %504 = dma.hbm_to_vmem [thread:$0]  %s497, 4096, %s499, %s487, 128, 128, 8
        $region68: #{tpu_custom_call.1} parent=63 // pred_fallthru
          _
        // Predicated region
        $region69: #{tpu_custom_call.1} parent=63 // pred_check
          %p505 = pneg %p78
        $region70: #{tpu_custom_call.1} parent=63 // pred_check_branch
          %507 = sbr.rel (%p505) target = $region72
        $region71: #{tpu_custom_call.1} parent=63 // pred_region
          %s508 = sand.u32 %s32, 1
          %s509 = scalar_lea.sflag [#allocation6], %s508
          %s510 = sand.u32 %s68, 1
          %s511 = smul.addr %s510, 128
          %s512 = scalar_lea.vmem [#allocation5], %s511
          %514 = vsyncadd %s509, 0
          %s515 = smul.addr %s32, 32
          %s516 = smul.addr %s515, 4
          %s517 = scalar_lea.hbm %s1, %s516
          %s518 = sshll.u32 %s517, 4
          %s519 = int_to_ptr.hbm [resolvable:$true] %s518
          %s520 = sshll.u32 %s512, 4
          %s521 = int_to_ptr.vmem [resolvable:$true] %s520
          %526 = dma.hbm_to_vmem [thread:$0]  %s519, 2048, %s521, %s509, 64, 64, 4
        $region72: #{tpu_custom_call.1} parent=63 // pred_fallthru
          _
      $region64: #{tpu_custom_call.1} parent=5 // pred_fallthru
        _
      %p527 = scmp.le.s32.totalorder 1, %s32
      %p528 = scmp.lt.s32.totalorder %s32, 5
      %p529 = pnand %p527, %p528
      %p530 = pneg %p529
      // Predicated region
      $region73: #{tpu_custom_call.1} parent=5 // pred_check
        _
      $region74: #{tpu_custom_call.1} parent=5 // pred_check_branch
        %532 = sbr.rel (%p529) target = $region76
      $region75: #{tpu_custom_call.1} parent=5 // pred_region
        %s533 = ssub.s32 %s32, 1
        %s534 = sand.u32 %s45, 1
        %s535 = scalar_lea.sflag [#allocation3], %s534
        %s536 = sand.u32 %s45, 1
        %s537 = smul.addr %s536, 256
        %s538 = scalar_lea.vmem [#allocation2], %s537
        // Predicated region
        $region77: #{tpu_custom_call.1} parent=75 // pred_check
          %p539 = pneg %p58
        $region78: #{tpu_custom_call.1} parent=75 // pred_check_branch
          %541 = sbr.rel (%p539) target = $region80
        $region79: #{tpu_custom_call.1} parent=75 // pred_region
          %543 = dma.done %s535, 4096
        $region80: #{tpu_custom_call.1} parent=75 // pred_fallthru
          _
        %s544 = sand.u32 %s37, 1
        %s545 = scalar_lea.sflag [#allocation6], %s544
        %s546 = sand.u32 %s71, 1
        %s547 = smul.addr %s546, 128
        %s548 = scalar_lea.vmem [#allocation5], %s547
        // Predicated region
        $region81: #{tpu_custom_call.1} parent=75 // pred_check
          %p549 = pneg %p84
        $region82: #{tpu_custom_call.1} parent=75 // pred_check_branch
          %551 = sbr.rel (%p549) target = $region84
        $region83: #{tpu_custom_call.1} parent=75 // pred_region
          %553 = dma.done %s545, 2048
        $region84: #{tpu_custom_call.1} parent=75 // pred_fallthru
          _
        // Predicated region
        $region85: #{tpu_custom_call.1} parent=75 // pred_check
          %p554 = pneg %p105
        $region86: #{tpu_custom_call.1} parent=75 // pred_check_branch
          %556 = sbr.rel (%p554) target = $region88
        $region87: #{tpu_custom_call.1} parent=75 // pred_region
          %558 = dma.done [#allocation6], 1024
        $region88: #{tpu_custom_call.1} parent=75 // pred_fallthru
          _
        // Predicated region
        $region89: #{tpu_custom_call.1} parent=75 // pred_check
          %p559 = pneg %p147
        $region90: #{tpu_custom_call.1} parent=75 // pred_check_branch
          %561 = sbr.rel (%p559) target = $region92
        $region91: #{tpu_custom_call.1} parent=75 // pred_region
          %563 = dma.done [#allocation9], 1024
        $region92: #{tpu_custom_call.1} parent=75 // pred_fallthru
          _
        // Predicated region
        $region93: #{tpu_custom_call.1} parent=75 // pred_check
          %p564 = pneg %p189
        $region94: #{tpu_custom_call.1} parent=75 // pred_check_branch
          %566 = sbr.rel (%p564) target = $region96
        $region95: #{tpu_custom_call.1} parent=75 // pred_region
          %568 = dma.done [#allocation9], 1024
        $region96: #{tpu_custom_call.1} parent=75 // pred_fallthru
          _
        // Predicated region
        $region97: #{tpu_custom_call.1} parent=75 // pred_check
          %p569 = pneg %p231
        $region98: #{tpu_custom_call.1} parent=75 // pred_check_branch
          %571 = sbr.rel (%p569) target = $region100
        $region99: #{tpu_custom_call.1} parent=75 // pred_region
          %573 = dma.done [#allocation12], 1024
        $region100: #{tpu_custom_call.1} parent=75 // pred_fallthru
          _
        // Predicated region
        $region101: #{tpu_custom_call.1} parent=75 // pred_check
          %p574 = pneg %p273
        $region102: #{tpu_custom_call.1} parent=75 // pred_check_branch
          %576 = sbr.rel (%p574) target = $region104
        $region103: #{tpu_custom_call.1} parent=75 // pred_region
          %578 = dma.done [#allocation12], 1024
        $region104: #{tpu_custom_call.1} parent=75 // pred_fallthru
          _
        // Predicated region
        $region105: #{tpu_custom_call.1} parent=75 // pred_check
          %p579 = pneg %p315
        $region106: #{tpu_custom_call.1} parent=75 // pred_check_branch
          %581 = sbr.rel (%p579) target = $region108
        $region107: #{tpu_custom_call.1} parent=75 // pred_region
          %583 = dma.done [#allocation15], 1024
        $region108: #{tpu_custom_call.1} parent=75 // pred_fallthru
          _
        %s584 = sand.u32 %s45, 1
        %s585 = scalar_lea.sflag [#allocation3], %s584
        %s586 = sand.u32 %s45, 1
        %s587 = smul.addr %s586, 256
        %s588 = scalar_lea.vmem [#allocation2], %s587
        %p589 = pneg %p58
        %p590 = pneg %p55
        %s591 = sand.u32 %s37, 1
        %s592 = scalar_lea.sflag [#allocation6], %s591
        %s593 = sand.u32 %s71, 1
        %s594 = smul.addr %s593, 128
        %s595 = scalar_lea.vmem [#allocation5], %s594
        %p596 = pneg %p84
        %p597 = pneg %p81
        %p598 = pneg %p105
        %p599 = pneg %p102
        %p600 = pneg %p126
        %p601 = pneg %p123
        %p602 = pneg %p147
        %p603 = pneg %p144
        %p604 = pneg %p168
        %p605 = pneg %p165
        %p606 = pneg %p189
        %p607 = pneg %p186
        %p608 = pneg %p210
        %p609 = pneg %p207
        %p610 = pneg %p231
        %p611 = pneg %p228
        %p612 = pneg %p252
        %p613 = pneg %p249
        %p614 = pneg %p273
        %p615 = pneg %p270
        %p616 = pneg %p294
        %p617 = pneg %p291
        %p618 = pneg %p315
        %p619 = pneg %p312
        %p620 = pneg %p336
        %p621 = pneg %p333
        %p622 = pneg %p362
        %p623 = pneg %p359
        %s624 = sand.u32 %s349, 1
        %s625 = scalar_lea.sflag [#allocation4], %s624
        %s626 = sand.u32 %s349, 1
        %s627 = smul.addr %s626, 128
        %s628 = scalar_lea.vmem [#allocation16], %s627
        %v629 = vld [vmem:[%s538] sm:$0xff]
        %v630 = vld [vmem:[%s538 + $0x8] sm:$0xff]
        %v631 = vld [vmem:[%s538 + $0x10] sm:$0xff]
        %v632 = vld [vmem:[%s538 + $0x18] sm:$0xff]
        %v633 = vld [vmem:[%s538 + $0x20] sm:$0xff]
        %v634 = vld [vmem:[%s538 + $0x28] sm:$0xff]
        %v635 = vld [vmem:[%s538 + $0x30] sm:$0xff]
        %v636 = vld [vmem:[%s538 + $0x38] sm:$0xff]
        %v637 = vld [vmem:[%s538 + $0x40] sm:$0xff]
        %v638 = vld [vmem:[%s538 + $0x48] sm:$0xff]
        %v639 = vld [vmem:[%s538 + $0x50] sm:$0xff]
        %v640 = vld [vmem:[%s538 + $0x58] sm:$0xff]
        %v641 = vld [vmem:[%s538 + $0x60] sm:$0xff]
        %v642 = vld [vmem:[%s538 + $0x68] sm:$0xff]
        %v643 = vld [vmem:[%s538 + $0x70] sm:$0xff]
        %v644 = vld [vmem:[%s538 + $0x78] sm:$0xff]
        %v645 = vld [vmem:[%s538 + $0x80] sm:$0xff]
        %v646 = vld [vmem:[%s538 + $0x88] sm:$0xff]
        %v647 = vld [vmem:[%s538 + $0x90] sm:$0xff]
        %v648 = vld [vmem:[%s538 + $0x98] sm:$0xff]
        %v649 = vld [vmem:[%s538 + $0xa0] sm:$0xff]
        %v650 = vld [vmem:[%s538 + $0xa8] sm:$0xff]
        %v651 = vld [vmem:[%s538 + $0xb0] sm:$0xff]
        %v652 = vld [vmem:[%s538 + $0xb8] sm:$0xff]
        %v653 = vld [vmem:[%s538 + $0xc0] sm:$0xff]
        %v654 = vld [vmem:[%s538 + $0xc8] sm:$0xff]
        %v655 = vld [vmem:[%s538 + $0xd0] sm:$0xff]
        %v656 = vld [vmem:[%s538 + $0xd8] sm:$0xff]
        %v657 = vld [vmem:[%s538 + $0xe0] sm:$0xff]
        %v658 = vld [vmem:[%s538 + $0xe8] sm:$0xff]
        %v659 = vld [vmem:[%s538 + $0xf0] sm:$0xff]
        %v660 = vld [vmem:[%s538 + $0xf8] sm:$0xff]
        %v661 = vld [vmem:[%s548] sm:$0xf]
        %v662 = vld [vmem:[%s548 + $0x4] sm:$0xf]
        %v663 = vld [vmem:[%s548 + $0x8] sm:$0xf]
        %v664 = vld [vmem:[%s548 + $0xc] sm:$0xf]
        %v665 = vld [vmem:[%s548 + $0x10] sm:$0xf]
        %v666 = vld [vmem:[%s548 + $0x14] sm:$0xf]
        %v667 = vld [vmem:[%s548 + $0x18] sm:$0xf]
        %v668 = vld [vmem:[%s548 + $0x1c] sm:$0xf]
        %v669 = vld [vmem:[%s548 + $0x20] sm:$0xf]
        %v670 = vld [vmem:[%s548 + $0x24] sm:$0xf]
        %v671 = vld [vmem:[%s548 + $0x28] sm:$0xf]
        %v672 = vld [vmem:[%s548 + $0x2c] sm:$0xf]
        %v673 = vld [vmem:[%s548 + $0x30] sm:$0xf]
        %v674 = vld [vmem:[%s548 + $0x34] sm:$0xf]
        %v675 = vld [vmem:[%s548 + $0x38] sm:$0xf]
        %v676 = vld [vmem:[%s548 + $0x3c] sm:$0xf]
        %v677 = vld [vmem:[%s548 + $0x40] sm:$0xf]
        %v678 = vld [vmem:[%s548 + $0x44] sm:$0xf]
        %v679 = vld [vmem:[%s548 + $0x48] sm:$0xf]
        %v680 = vld [vmem:[%s548 + $0x4c] sm:$0xf]
        %v681 = vld [vmem:[%s548 + $0x50] sm:$0xf]
        %v682 = vld [vmem:[%s548 + $0x54] sm:$0xf]
        %v683 = vld [vmem:[%s548 + $0x58] sm:$0xf]
        %v684 = vld [vmem:[%s548 + $0x5c] sm:$0xf]
        %v685 = vld [vmem:[%s548 + $0x60] sm:$0xf]
        %v686 = vld [vmem:[%s548 + $0x64] sm:$0xf]
        %v687 = vld [vmem:[%s548 + $0x68] sm:$0xf]
        %v688 = vld [vmem:[%s548 + $0x6c] sm:$0xf]
        %v689 = vld [vmem:[%s548 + $0x70] sm:$0xf]
        %v690 = vld [vmem:[%s548 + $0x74] sm:$0xf]
        %v691 = vld [vmem:[%s548 + $0x78] sm:$0xf]
        %v692 = vld [vmem:[%s548 + $0x7c] sm:$0xf]
        %v693 = vunpack.c.l.bf16 %v661
        %v694 = vunpack.c.l.bf16 %v662
        %v695 = vunpack.c.l.bf16 %v663
        %v696 = vunpack.c.l.bf16 %v664
        %v697 = vunpack.c.l.bf16 %v665
        %v698 = vunpack.c.l.bf16 %v666
        %v699 = vunpack.c.l.bf16 %v667
        %v700 = vunpack.c.l.bf16 %v668
        %v701 = vunpack.c.l.bf16 %v669
        %v702 = vunpack.c.l.bf16 %v670
        %v703 = vunpack.c.l.bf16 %v671
        %v704 = vunpack.c.l.bf16 %v672
        %v705 = vunpack.c.l.bf16 %v673
        %v706 = vunpack.c.l.bf16 %v674
        %v707 = vunpack.c.l.bf16 %v675
        %v708 = vunpack.c.l.bf16 %v676
        %v709 = vunpack.c.l.bf16 %v677
        %v710 = vunpack.c.l.bf16 %v678
        %v711 = vunpack.c.l.bf16 %v679
        %v712 = vunpack.c.l.bf16 %v680
        %v713 = vunpack.c.l.bf16 %v681
        %v714 = vunpack.c.l.bf16 %v682
        %v715 = vunpack.c.l.bf16 %v683
        %v716 = vunpack.c.l.bf16 %v684
        %v717 = vunpack.c.l.bf16 %v685
        %v718 = vunpack.c.l.bf16 %v686
        %v719 = vunpack.c.l.bf16 %v687
        %v720 = vunpack.c.l.bf16 %v688
        %v721 = vunpack.c.l.bf16 %v689
        %v722 = vunpack.c.l.bf16 %v690
        %v723 = vunpack.c.l.bf16 %v691
        %v724 = vunpack.c.l.bf16 %v692
        %v757 = vunpack.c.l.b16 %v629
        %v758 = vunpack.c.h.b16 %v629
        %v759 = vunpack.c.l.b16 %v630
        %v760 = vunpack.c.h.b16 %v630
        %v761 = vunpack.c.l.b16 %v631
        %v762 = vunpack.c.h.b16 %v631
        %v763 = vunpack.c.l.b16 %v632
        %v764 = vunpack.c.h.b16 %v632
        %v765 = vunpack.c.l.b16 %v633
        %v766 = vunpack.c.h.b16 %v633
        %v767 = vunpack.c.l.b16 %v634
        %v768 = vunpack.c.h.b16 %v634
        %v769 = vunpack.c.l.b16 %v635
        %v770 = vunpack.c.h.b16 %v635
        %v771 = vunpack.c.l.b16 %v636
        %v772 = vunpack.c.h.b16 %v636
        %v773 = vunpack.c.l.b16 %v637
        %v774 = vunpack.c.h.b16 %v637
        %v775 = vunpack.c.l.b16 %v638
        %v776 = vunpack.c.h.b16 %v638
        %v777 = vunpack.c.l.b16 %v639
        %v778 = vunpack.c.h.b16 %v639
        %v779 = vunpack.c.l.b16 %v640
        %v780 = vunpack.c.h.b16 %v640
        %v781 = vunpack.c.l.b16 %v641
        %v782 = vunpack.c.h.b16 %v641
        %v783 = vunpack.c.l.b16 %v642
        %v784 = vunpack.c.h.b16 %v642
        %v785 = vunpack.c.l.b16 %v643
        %v786 = vunpack.c.h.b16 %v643
        %v787 = vunpack.c.l.b16 %v644
        %v788 = vunpack.c.h.b16 %v644
        %v789 = vunpack.c.l.b16 %v645
        %v790 = vunpack.c.h.b16 %v645
        %v791 = vunpack.c.l.b16 %v646
        %v792 = vunpack.c.h.b16 %v646
        %v793 = vunpack.c.l.b16 %v647
        %v794 = vunpack.c.h.b16 %v647
        %v795 = vunpack.c.l.b16 %v648
        %v796 = vunpack.c.h.b16 %v648
        %v797 = vunpack.c.l.b16 %v649
        %v798 = vunpack.c.h.b16 %v649
        %v799 = vunpack.c.l.b16 %v650
        %v800 = vunpack.c.h.b16 %v650
        %v801 = vunpack.c.l.b16 %v651
        %v802 = vunpack.c.h.b16 %v651
        %v803 = vunpack.c.l.b16 %v652
        %v804 = vunpack.c.h.b16 %v652
        %v805 = vunpack.c.l.b16 %v653
        %v806 = vunpack.c.h.b16 %v653
        %v807 = vunpack.c.l.b16 %v654
        %v808 = vunpack.c.h.b16 %v654
        %v809 = vunpack.c.l.b16 %v655
        %v810 = vunpack.c.h.b16 %v655
        %v811 = vunpack.c.l.b16 %v656
        %v812 = vunpack.c.h.b16 %v656
        %v813 = vunpack.c.l.b16 %v657
        %v814 = vunpack.c.h.b16 %v657
        %v815 = vunpack.c.l.b16 %v658
        %v816 = vunpack.c.h.b16 %v658
        %v817 = vunpack.c.l.b16 %v659
        %v818 = vunpack.c.h.b16 %v659
        %v819 = vunpack.c.l.b16 %v660
        %v820 = vunpack.c.h.b16 %v660
        %v821 = vpack.c.b16 %v759, %v757
        %v822 = vpack.c.b16 %v760, %v758
        %v823 = vpack.c.b16 %v763, %v761
        %v824 = vpack.c.b16 %v764, %v762
        %v825 = vpack.c.b16 %v767, %v765
        %v826 = vpack.c.b16 %v768, %v766
        %v827 = vpack.c.b16 %v771, %v769
        %v828 = vpack.c.b16 %v772, %v770
        %v829 = vpack.c.b16 %v775, %v773
        %v830 = vpack.c.b16 %v776, %v774
        %v831 = vpack.c.b16 %v779, %v777
        %v832 = vpack.c.b16 %v780, %v778
        %v833 = vpack.c.b16 %v783, %v781
        %v834 = vpack.c.b16 %v784, %v782
        %v835 = vpack.c.b16 %v787, %v785
        %v836 = vpack.c.b16 %v788, %v786
        %v837 = vpack.c.b16 %v791, %v789
        %v838 = vpack.c.b16 %v792, %v790
        %v839 = vpack.c.b16 %v795, %v793
        %v840 = vpack.c.b16 %v796, %v794
        %v841 = vpack.c.b16 %v799, %v797
        %v842 = vpack.c.b16 %v800, %v798
        %v843 = vpack.c.b16 %v803, %v801
        %v844 = vpack.c.b16 %v804, %v802
        %v845 = vpack.c.b16 %v807, %v805
        %v846 = vpack.c.b16 %v808, %v806
        %v847 = vpack.c.b16 %v811, %v809
        %v848 = vpack.c.b16 %v812, %v810
        %v849 = vpack.c.b16 %v815, %v813
        %v850 = vpack.c.b16 %v816, %v814
        %v851 = vpack.c.b16 %v819, %v817
        %v852 = vpack.c.b16 %v820, %v818
        %v917 = vunpack.c.l.b16 %v661
        %v918 = vunpack.c.l.b16 %v662
        %v919 = vunpack.c.l.b16 %v663
        %v920 = vunpack.c.l.b16 %v664
        %v921 = vunpack.c.l.b16 %v665
        %v922 = vunpack.c.l.b16 %v666
        %v923 = vunpack.c.l.b16 %v667
        %v924 = vunpack.c.l.b16 %v668
        %v925 = vunpack.c.l.b16 %v669
        %v926 = vunpack.c.l.b16 %v670
        %v927 = vunpack.c.l.b16 %v671
        %v928 = vunpack.c.l.b16 %v672
        %v929 = vunpack.c.l.b16 %v673
        %v930 = vunpack.c.l.b16 %v674
        %v931 = vunpack.c.l.b16 %v675
        %v932 = vunpack.c.l.b16 %v676
        %v933 = vunpack.c.l.b16 %v677
        %v934 = vunpack.c.l.b16 %v678
        %v935 = vunpack.c.l.b16 %v679
        %v936 = vunpack.c.l.b16 %v680
        %v937 = vunpack.c.l.b16 %v681
        %v938 = vunpack.c.l.b16 %v682
        %v939 = vunpack.c.l.b16 %v683
        %v940 = vunpack.c.l.b16 %v684
        %v941 = vunpack.c.l.b16 %v685
        %v942 = vunpack.c.l.b16 %v686
        %v943 = vunpack.c.l.b16 %v687
        %v944 = vunpack.c.l.b16 %v688
        %v945 = vunpack.c.l.b16 %v689
        %v946 = vunpack.c.l.b16 %v690
        %v947 = vunpack.c.l.b16 %v691
        %v948 = vunpack.c.l.b16 %v692
        %v949 = vpack.c.b16 %v918, %v917
        %v950 = vpack.c.b16 %v920, %v919
        %v951 = vpack.c.b16 %v922, %v921
        %v952 = vpack.c.b16 %v924, %v923
        %v953 = vpack.c.b16 %v926, %v925
        %v954 = vpack.c.b16 %v928, %v927
        %v955 = vpack.c.b16 %v930, %v929
        %v956 = vpack.c.b16 %v932, %v931
        %v957 = vpack.c.b16 %v934, %v933
        %v958 = vpack.c.b16 %v936, %v935
        %v959 = vpack.c.b16 %v938, %v937
        %v960 = vpack.c.b16 %v940, %v939
        %v961 = vpack.c.b16 %v942, %v941
        %v962 = vpack.c.b16 %v944, %v943
        %v963 = vpack.c.b16 %v946, %v945
        %v964 = vpack.c.b16 %v948, %v947
        %981 = vmatpush.bf16.msra.mxu0 %v956
        %982 = vmatpush.bf16.msra.mxu0 %v955
        %983 = vmatpush.bf16.msra.mxu0 %v954
        %984 = vmatpush.bf16.msra.mxu0 %v953
        %985 = vmatpush.bf16.msra.mxu0 %v952
        %986 = vmatpush.bf16.msra.mxu0 %v951
        %987 = vmatpush.bf16.msra.mxu0 %v950
        %988 = vmatpush.bf16.msra.mxu0 %v949
        %989 = vmatmul.bf16.gmra.mxu0 %v821
        %v990 = vpop.f32.mrf.mxu0
        %v991 = vadd.f32 0.0, %v990
        %v992 = vpop.f32.mrf.mxu0
        %v993 = vadd.f32 0.0, %v992
        %994 = vmatmul.bf16.gmra.mxu0 %v823
        %v995 = vpop.f32.mrf.mxu0
        %v996 = vadd.f32 0.0, %v995
        %v997 = vpop.f32.mrf.mxu0
        %v998 = vadd.f32 0.0, %v997
        %999 = vmatmul.bf16.gmra.mxu0 %v825
        %v1000 = vpop.f32.mrf.mxu0
        %v1001 = vadd.f32 0.0, %v1000
        %v1002 = vpop.f32.mrf.mxu0
        %v1003 = vadd.f32 0.0, %v1002
        %1004 = vmatmul.bf16.gmra.mxu0 %v827
        %v1005 = vpop.f32.mrf.mxu0
        %v1006 = vadd.f32 0.0, %v1005
        %v1007 = vpop.f32.mrf.mxu0
        %v1008 = vadd.f32 0.0, %v1007
        %1009 = vmatmul.bf16.gmra.mxu0 %v829
        %v1010 = vpop.f32.mrf.mxu0
        %v1011 = vadd.f32 0.0, %v1010
        %v1012 = vpop.f32.mrf.mxu0
        %v1013 = vadd.f32 0.0, %v1012
        %1014 = vmatmul.bf16.gmra.mxu0 %v831
        %v1015 = vpop.f32.mrf.mxu0
        %v1016 = vadd.f32 0.0, %v1015
        %v1017 = vpop.f32.mrf.mxu0
        %v1018 = vadd.f32 0.0, %v1017
        %1019 = vmatmul.bf16.gmra.mxu0 %v833
        %v1020 = vpop.f32.mrf.mxu0
        %v1021 = vadd.f32 0.0, %v1020
        %v1022 = vpop.f32.mrf.mxu0
        %v1023 = vadd.f32 0.0, %v1022
        %1024 = vmatmul.bf16.gmra.mxu0 %v835
        %v1025 = vpop.f32.mrf.mxu0
        %v1026 = vadd.f32 0.0, %v1025
        %v1027 = vpop.f32.mrf.mxu0
        %v1028 = vadd.f32 0.0, %v1027
        %1029 = vmatmul.bf16.gmra.mxu0 %v837
        %v1030 = vpop.f32.mrf.mxu0
        %v1031 = vadd.f32 0.0, %v1030
        %v1032 = vpop.f32.mrf.mxu0
        %v1033 = vadd.f32 0.0, %v1032
        %1034 = vmatmul.bf16.gmra.mxu0 %v839
        %v1035 = vpop.f32.mrf.mxu0
        %v1036 = vadd.f32 0.0, %v1035
        %v1037 = vpop.f32.mrf.mxu0
        %v1038 = vadd.f32 0.0, %v1037
        %1039 = vmatmul.bf16.gmra.mxu0 %v841
        %v1040 = vpop.f32.mrf.mxu0
        %v1041 = vadd.f32 0.0, %v1040
        %v1042 = vpop.f32.mrf.mxu0
        %v1043 = vadd.f32 0.0, %v1042
        %1044 = vmatmul.bf16.gmra.mxu0 %v843
        %v1045 = vpop.f32.mrf.mxu0
        %v1046 = vadd.f32 0.0, %v1045
        %v1047 = vpop.f32.mrf.mxu0
        %v1048 = vadd.f32 0.0, %v1047
        %1049 = vmatmul.bf16.gmra.mxu0 %v845
        %v1050 = vpop.f32.mrf.mxu0
        %v1051 = vadd.f32 0.0, %v1050
        %v1052 = vpop.f32.mrf.mxu0
        %v1053 = vadd.f32 0.0, %v1052
        %1054 = vmatmul.bf16.gmra.mxu0 %v847
        %v1055 = vpop.f32.mrf.mxu0
        %v1056 = vadd.f32 0.0, %v1055
        %v1057 = vpop.f32.mrf.mxu0
        %v1058 = vadd.f32 0.0, %v1057
        %1059 = vmatmul.bf16.gmra.mxu0 %v849
        %v1060 = vpop.f32.mrf.mxu0
        %v1061 = vadd.f32 0.0, %v1060
        %v1062 = vpop.f32.mrf.mxu0
        %v1063 = vadd.f32 0.0, %v1062
        %1064 = vmatmul.bf16.gmra.mxu0 %v851
        %v1065 = vpop.f32.mrf.mxu0
        %v1066 = vadd.f32 0.0, %v1065
        %v1067 = vpop.f32.mrf.mxu0
        %v1068 = vadd.f32 0.0, %v1067
        %1069 = vdwg.mxu0
        %1070 = vmatpush.bf16.msra.mxu0 %v964
        %1071 = vmatpush.bf16.msra.mxu0 %v963
        %1072 = vmatpush.bf16.msra.mxu0 %v962
        %1073 = vmatpush.bf16.msra.mxu0 %v961
        %1074 = vmatpush.bf16.msra.mxu0 %v960
        %1075 = vmatpush.bf16.msra.mxu0 %v959
        %1076 = vmatpush.bf16.msra.mxu0 %v958
        %1077 = vmatpush.bf16.msra.mxu0 %v957
        %1078 = vmatmul.bf16.gmra.mxu0 %v822
        %v1079 = vpop.f32.mrf.mxu0
        %v1080 = vadd.f32 %v991, %v1079
        %v1081 = vpop.f32.mrf.mxu0
        %v1082 = vadd.f32 %v993, %v1081
        %1083 = vmatmul.bf16.gmra.mxu0 %v824
        %v1084 = vpop.f32.mrf.mxu0
        %v1085 = vadd.f32 %v996, %v1084
        %v1086 = vpop.f32.mrf.mxu0
        %v1087 = vadd.f32 %v998, %v1086
        %1088 = vmatmul.bf16.gmra.mxu0 %v826
        %v1089 = vpop.f32.mrf.mxu0
        %v1090 = vadd.f32 %v1001, %v1089
        %v1091 = vpop.f32.mrf.mxu0
        %v1092 = vadd.f32 %v1003, %v1091
        %1093 = vmatmul.bf16.gmra.mxu0 %v828
        %v1094 = vpop.f32.mrf.mxu0
        %v1095 = vadd.f32 %v1006, %v1094
        %v1096 = vpop.f32.mrf.mxu0
        %v1097 = vadd.f32 %v1008, %v1096
        %1098 = vmatmul.bf16.gmra.mxu0 %v830
        %v1099 = vpop.f32.mrf.mxu0
        %v1100 = vadd.f32 %v1011, %v1099
        %v1101 = vpop.f32.mrf.mxu0
        %v1102 = vadd.f32 %v1013, %v1101
        %1103 = vmatmul.bf16.gmra.mxu0 %v832
        %v1104 = vpop.f32.mrf.mxu0
        %v1105 = vadd.f32 %v1016, %v1104
        %v1106 = vpop.f32.mrf.mxu0
        %v1107 = vadd.f32 %v1018, %v1106
        %1108 = vmatmul.bf16.gmra.mxu0 %v834
        %v1109 = vpop.f32.mrf.mxu0
        %v1110 = vadd.f32 %v1021, %v1109
        %v1111 = vpop.f32.mrf.mxu0
        %v1112 = vadd.f32 %v1023, %v1111
        %1113 = vmatmul.bf16.gmra.mxu0 %v836
        %v1114 = vpop.f32.mrf.mxu0
        %v1115 = vadd.f32 %v1026, %v1114
        %v1116 = vpop.f32.mrf.mxu0
        %v1117 = vadd.f32 %v1028, %v1116
        %1118 = vmatmul.bf16.gmra.mxu0 %v838
        %v1119 = vpop.f32.mrf.mxu0
        %v1120 = vadd.f32 %v1031, %v1119
        %v1121 = vpop.f32.mrf.mxu0
        %v1122 = vadd.f32 %v1033, %v1121
        %1123 = vmatmul.bf16.gmra.mxu0 %v840
        %v1124 = vpop.f32.mrf.mxu0
        %v1125 = vadd.f32 %v1036, %v1124
        %v1126 = vpop.f32.mrf.mxu0
        %v1127 = vadd.f32 %v1038, %v1126
        %1128 = vmatmul.bf16.gmra.mxu0 %v842
        %v1129 = vpop.f32.mrf.mxu0
        %v1130 = vadd.f32 %v1041, %v1129
        %v1131 = vpop.f32.mrf.mxu0
        %v1132 = vadd.f32 %v1043, %v1131
        %1133 = vmatmul.bf16.gmra.mxu0 %v844
        %v1134 = vpop.f32.mrf.mxu0
        %v1135 = vadd.f32 %v1046, %v1134
        %v1136 = vpop.f32.mrf.mxu0
        %v1137 = vadd.f32 %v1048, %v1136
        %1138 = vmatmul.bf16.gmra.mxu0 %v846
        %v1139 = vpop.f32.mrf.mxu0
        %v1140 = vadd.f32 %v1051, %v1139
        %v1141 = vpop.f32.mrf.mxu0
        %v1142 = vadd.f32 %v1053, %v1141
        %1143 = vmatmul.bf16.gmra.mxu0 %v848
        %v1144 = vpop.f32.mrf.mxu0
        %v1145 = vadd.f32 %v1056, %v1144
        %v1146 = vpop.f32.mrf.mxu0
        %v1147 = vadd.f32 %v1058, %v1146
        %1148 = vmatmul.bf16.gmra.mxu0 %v850
        %v1149 = vpop.f32.mrf.mxu0
        %v1150 = vadd.f32 %v1061, %v1149
        %v1151 = vpop.f32.mrf.mxu0
        %v1152 = vadd.f32 %v1063, %v1151
        %1153 = vmatmul.bf16.gmra.mxu0 %v852
        %v1154 = vpop.f32.mrf.mxu0
        %v1155 = vadd.f32 %v1066, %v1154
        %v1156 = vpop.f32.mrf.mxu0
        %v1157 = vadd.f32 %v1068, %v1156
        %1158 = vdwg.mxu0
        %v1159 = vadd.f32 %v693, %v1080
        %v1160 = vadd.f32 %v694, %v1082
        %v1161 = vadd.f32 %v695, %v1085
        %v1162 = vadd.f32 %v696, %v1087
        %v1163 = vadd.f32 %v697, %v1090
        %v1164 = vadd.f32 %v698, %v1092
        %v1165 = vadd.f32 %v699, %v1095
        %v1166 = vadd.f32 %v700, %v1097
        %v1167 = vadd.f32 %v701, %v1100
        %v1168 = vadd.f32 %v702, %v1102
        %v1169 = vadd.f32 %v703, %v1105
        %v1170 = vadd.f32 %v704, %v1107
        %v1171 = vadd.f32 %v705, %v1110
        %v1172 = vadd.f32 %v706, %v1112
        %v1173 = vadd.f32 %v707, %v1115
        %v1174 = vadd.f32 %v708, %v1117
        %v1175 = vadd.f32 %v709, %v1120
        %v1176 = vadd.f32 %v710, %v1122
        %v1177 = vadd.f32 %v711, %v1125
        %v1178 = vadd.f32 %v712, %v1127
        %v1179 = vadd.f32 %v713, %v1130
        %v1180 = vadd.f32 %v714, %v1132
        %v1181 = vadd.f32 %v715, %v1135
        %v1182 = vadd.f32 %v716, %v1137
        %v1183 = vadd.f32 %v717, %v1140
        %v1184 = vadd.f32 %v718, %v1142
        %v1185 = vadd.f32 %v719, %v1145
        %v1186 = vadd.f32 %v720, %v1147
        %v1187 = vadd.f32 %v721, %v1150
        %v1188 = vadd.f32 %v722, %v1152
        %v1189 = vadd.f32 %v723, %v1155
        %v1190 = vadd.f32 %v724, %v1157
        %v1191 = vpack.c.bf16 %v1160, %v1159
        %v1192 = vpack.c.bf16 %v1162, %v1161
        %v1193 = vpack.c.bf16 %v1164, %v1163
        %v1194 = vpack.c.bf16 %v1166, %v1165
        %v1195 = vpack.c.bf16 %v1168, %v1167
        %v1196 = vpack.c.bf16 %v1170, %v1169
        %v1197 = vpack.c.bf16 %v1172, %v1171
        %v1198 = vpack.c.bf16 %v1174, %v1173
        %v1199 = vpack.c.bf16 %v1176, %v1175
        %v1200 = vpack.c.bf16 %v1178, %v1177
        %v1201 = vpack.c.bf16 %v1180, %v1179
        %v1202 = vpack.c.bf16 %v1182, %v1181
        %v1203 = vpack.c.bf16 %v1184, %v1183
        %v1204 = vpack.c.bf16 %v1186, %v1185
        %v1205 = vpack.c.bf16 %v1188, %v1187
        %v1206 = vpack.c.bf16 %v1190, %v1189
        %v1207 = vld [vmem:[#allocation7] sm:$0xf]
        %v1208 = vld [vmem:[#allocation7 + $0x4] sm:$0xf]
        %v1209 = vld [vmem:[#allocation7 + $0x8] sm:$0xf]
        %v1210 = vld [vmem:[#allocation7 + $0xc] sm:$0xf]
        %v1211 = vld [vmem:[#allocation7 + $0x10] sm:$0xf]
        %v1212 = vld [vmem:[#allocation7 + $0x14] sm:$0xf]
        %v1213 = vld [vmem:[#allocation7 + $0x18] sm:$0xf]
        %v1214 = vld [vmem:[#allocation7 + $0x1c] sm:$0xf]
        %v1215 = vld [vmem:[#allocation7 + $0x20] sm:$0xf]
        %v1216 = vld [vmem:[#allocation7 + $0x24] sm:$0xf]
        %v1217 = vld [vmem:[#allocation7 + $0x28] sm:$0xf]
        %v1218 = vld [vmem:[#allocation7 + $0x2c] sm:$0xf]
        %v1219 = vld [vmem:[#allocation7 + $0x30] sm:$0xf]
        %v1220 = vld [vmem:[#allocation7 + $0x34] sm:$0xf]
        %v1221 = vld [vmem:[#allocation7 + $0x38] sm:$0xf]
        %v1222 = vld [vmem:[#allocation7 + $0x3c] sm:$0xf]
        %v1223 = vld [vmem:[%s3] sm:$0x1]
        %v1225 = vperm.slane %v1223, 0
        %v1243 = vunpack.c.l.b16 %v1207
        %v1244 = vunpack.c.l.b16 %v1208
        %v1245 = vunpack.c.l.b16 %v1209
        %v1246 = vunpack.c.l.b16 %v1210
        %v1247 = vunpack.c.l.b16 %v1211
        %v1248 = vunpack.c.l.b16 %v1212
        %v1249 = vunpack.c.l.b16 %v1213
        %v1250 = vunpack.c.l.b16 %v1214
        %v1251 = vunpack.c.l.b16 %v1215
        %v1252 = vunpack.c.l.b16 %v1216
        %v1253 = vunpack.c.l.b16 %v1217
        %v1254 = vunpack.c.l.b16 %v1218
        %v1255 = vunpack.c.l.b16 %v1219
        %v1256 = vunpack.c.l.b16 %v1220
        %v1257 = vunpack.c.l.b16 %v1221
        %v1258 = vunpack.c.l.b16 %v1222
        %v1259 = vpack.c.b16 %v1244, %v1243
        %v1260 = vpack.c.b16 %v1246, %v1245
        %v1261 = vpack.c.b16 %v1248, %v1247
        %v1262 = vpack.c.b16 %v1250, %v1249
        %v1263 = vpack.c.b16 %v1252, %v1251
        %v1264 = vpack.c.b16 %v1254, %v1253
        %v1265 = vpack.c.b16 %v1256, %v1255
        %v1266 = vpack.c.b16 %v1258, %v1257
        %1275 = vmatpush.bf16.msra.mxu0 %v1266
        %1276 = vmatpush.bf16.msra.mxu0 %v1265
        %1277 = vmatpush.bf16.msra.mxu0 %v1264
        %1278 = vmatpush.bf16.msra.mxu0 %v1263
        %1279 = vmatpush.bf16.msra.mxu0 %v1262
        %1280 = vmatpush.bf16.msra.mxu0 %v1261
        %1281 = vmatpush.bf16.msra.mxu0 %v1260
        %1282 = vmatpush.bf16.msra.mxu0 %v1259
        %1283 = vmatmul.bf16.gmra.mxu0 %v1191
        %v1284 = vpop.f32.mrf.mxu0
        %v1285 = vadd.f32 %v1225, %v1284
        %v1286 = vpop.f32.mrf.mxu0
        %v1287 = vadd.f32 %v1225, %v1286
        %1288 = vmatmul.bf16.gmra.mxu0 %v1192
        %v1289 = vpop.f32.mrf.mxu0
        %v1290 = vadd.f32 %v1225, %v1289
        %v1291 = vpop.f32.mrf.mxu0
        %v1292 = vadd.f32 %v1225, %v1291
        %1293 = vmatmul.bf16.gmra.mxu0 %v1193
        %v1294 = vpop.f32.mrf.mxu0
        %v1295 = vadd.f32 %v1225, %v1294
        %v1296 = vpop.f32.mrf.mxu0
        %v1297 = vadd.f32 %v1225, %v1296
        %1298 = vmatmul.bf16.gmra.mxu0 %v1194
        %v1299 = vpop.f32.mrf.mxu0
        %v1300 = vadd.f32 %v1225, %v1299
        %v1301 = vpop.f32.mrf.mxu0
        %v1302 = vadd.f32 %v1225, %v1301
        %1303 = vmatmul.bf16.gmra.mxu0 %v1195
        %v1304 = vpop.f32.mrf.mxu0
        %v1305 = vadd.f32 %v1225, %v1304
        %v1306 = vpop.f32.mrf.mxu0
        %v1307 = vadd.f32 %v1225, %v1306
        %1308 = vmatmul.bf16.gmra.mxu0 %v1196
        %v1309 = vpop.f32.mrf.mxu0
        %v1310 = vadd.f32 %v1225, %v1309
        %v1311 = vpop.f32.mrf.mxu0
        %v1312 = vadd.f32 %v1225, %v1311
        %1313 = vmatmul.bf16.gmra.mxu0 %v1197
        %v1314 = vpop.f32.mrf.mxu0
        %v1315 = vadd.f32 %v1225, %v1314
        %v1316 = vpop.f32.mrf.mxu0
        %v1317 = vadd.f32 %v1225, %v1316
        %1318 = vmatmul.bf16.gmra.mxu0 %v1198
        %v1319 = vpop.f32.mrf.mxu0
        %v1320 = vadd.f32 %v1225, %v1319
        %v1321 = vpop.f32.mrf.mxu0
        %v1322 = vadd.f32 %v1225, %v1321
        %1323 = vmatmul.bf16.gmra.mxu0 %v1199
        %v1324 = vpop.f32.mrf.mxu0
        %v1325 = vadd.f32 %v1225, %v1324
        %v1326 = vpop.f32.mrf.mxu0
        %v1327 = vadd.f32 %v1225, %v1326
        %1328 = vmatmul.bf16.gmra.mxu0 %v1200
        %v1329 = vpop.f32.mrf.mxu0
        %v1330 = vadd.f32 %v1225, %v1329
        %v1331 = vpop.f32.mrf.mxu0
        %v1332 = vadd.f32 %v1225, %v1331
        %1333 = vmatmul.bf16.gmra.mxu0 %v1201
        %v1334 = vpop.f32.mrf.mxu0
        %v1335 = vadd.f32 %v1225, %v1334
        %v1336 = vpop.f32.mrf.mxu0
        %v1337 = vadd.f32 %v1225, %v1336
        %1338 = vmatmul.bf16.gmra.mxu0 %v1202
        %v1339 = vpop.f32.mrf.mxu0
        %v1340 = vadd.f32 %v1225, %v1339
        %v1341 = vpop.f32.mrf.mxu0
        %v1342 = vadd.f32 %v1225, %v1341
        %1343 = vmatmul.bf16.gmra.mxu0 %v1203
        %v1344 = vpop.f32.mrf.mxu0
        %v1345 = vadd.f32 %v1225, %v1344
        %v1346 = vpop.f32.mrf.mxu0
        %v1347 = vadd.f32 %v1225, %v1346
        %1348 = vmatmul.bf16.gmra.mxu0 %v1204
        %v1349 = vpop.f32.mrf.mxu0
        %v1350 = vadd.f32 %v1225, %v1349
        %v1351 = vpop.f32.mrf.mxu0
        %v1352 = vadd.f32 %v1225, %v1351
        %1353 = vmatmul.bf16.gmra.mxu0 %v1205
        %v1354 = vpop.f32.mrf.mxu0
        %v1355 = vadd.f32 %v1225, %v1354
        %v1356 = vpop.f32.mrf.mxu0
        %v1357 = vadd.f32 %v1225, %v1356
        %1358 = vmatmul.bf16.gmra.mxu0 %v1206
        %v1359 = vpop.f32.mrf.mxu0
        %v1360 = vadd.f32 %v1225, %v1359
        %v1361 = vpop.f32.mrf.mxu0
        %v1362 = vadd.f32 %v1225, %v1361
        %1363 = vdwg.mxu0
        %v1364 = vmax.f32 %v1285, 0.0
        %v1365 = vmax.f32 %v1287, 0.0
        %v1366 = vmax.f32 %v1290, 0.0
        %v1367 = vmax.f32 %v1292, 0.0
        %v1368 = vmax.f32 %v1295, 0.0
        %v1369 = vmax.f32 %v1297, 0.0
        %v1370 = vmax.f32 %v1300, 0.0
        %v1371 = vmax.f32 %v1302, 0.0
        %v1372 = vmax.f32 %v1305, 0.0
        %v1373 = vmax.f32 %v1307, 0.0
        %v1374 = vmax.f32 %v1310, 0.0
        %v1375 = vmax.f32 %v1312, 0.0
        %v1376 = vmax.f32 %v1315, 0.0
        %v1377 = vmax.f32 %v1317, 0.0
        %v1378 = vmax.f32 %v1320, 0.0
        %v1379 = vmax.f32 %v1322, 0.0
        %v1380 = vmax.f32 %v1325, 0.0
        %v1381 = vmax.f32 %v1327, 0.0
        %v1382 = vmax.f32 %v1330, 0.0
        %v1383 = vmax.f32 %v1332, 0.0
        %v1384 = vmax.f32 %v1335, 0.0
        %v1385 = vmax.f32 %v1337, 0.0
        %v1386 = vmax.f32 %v1340, 0.0
        %v1387 = vmax.f32 %v1342, 0.0
        %v1388 = vmax.f32 %v1345, 0.0
        %v1389 = vmax.f32 %v1347, 0.0
        %v1390 = vmax.f32 %v1350, 0.0
        %v1391 = vmax.f32 %v1352, 0.0
        %v1392 = vmax.f32 %v1355, 0.0
        %v1393 = vmax.f32 %v1357, 0.0
        %v1394 = vmax.f32 %v1360, 0.0
        %v1395 = vmax.f32 %v1362, 0.0
        %v1396 = vpack.c.bf16 %v1365, %v1364
        %v1397 = vpack.c.bf16 %v1367, %v1366
        %v1398 = vpack.c.bf16 %v1369, %v1368
        %v1399 = vpack.c.bf16 %v1371, %v1370
        %v1400 = vpack.c.bf16 %v1373, %v1372
        %v1401 = vpack.c.bf16 %v1375, %v1374
        %v1402 = vpack.c.bf16 %v1377, %v1376
        %v1403 = vpack.c.bf16 %v1379, %v1378
        %v1404 = vpack.c.bf16 %v1381, %v1380
        %v1405 = vpack.c.bf16 %v1383, %v1382
        %v1406 = vpack.c.bf16 %v1385, %v1384
        %v1407 = vpack.c.bf16 %v1387, %v1386
        %v1408 = vpack.c.bf16 %v1389, %v1388
        %v1409 = vpack.c.bf16 %v1391, %v1390
        %v1410 = vpack.c.bf16 %v1393, %v1392
        %v1411 = vpack.c.bf16 %v1395, %v1394
        %v1412 = vld [vmem:[#allocation8] sm:$0xf]
        %v1413 = vld [vmem:[#allocation8 + $0x4] sm:$0xf]
        %v1414 = vld [vmem:[#allocation8 + $0x8] sm:$0xf]
        %v1415 = vld [vmem:[#allocation8 + $0xc] sm:$0xf]
        %v1416 = vld [vmem:[#allocation8 + $0x10] sm:$0xf]
        %v1417 = vld [vmem:[#allocation8 + $0x14] sm:$0xf]
        %v1418 = vld [vmem:[#allocation8 + $0x18] sm:$0xf]
        %v1419 = vld [vmem:[#allocation8 + $0x1c] sm:$0xf]
        %v1420 = vld [vmem:[#allocation8 + $0x20] sm:$0xf]
        %v1421 = vld [vmem:[#allocation8 + $0x24] sm:$0xf]
        %v1422 = vld [vmem:[#allocation8 + $0x28] sm:$0xf]
        %v1423 = vld [vmem:[#allocation8 + $0x2c] sm:$0xf]
        %v1424 = vld [vmem:[#allocation8 + $0x30] sm:$0xf]
        %v1425 = vld [vmem:[#allocation8 + $0x34] sm:$0xf]
        %v1426 = vld [vmem:[#allocation8 + $0x38] sm:$0xf]
        %v1427 = vld [vmem:[#allocation8 + $0x3c] sm:$0xf]
        %v1428 = vld [vmem:[%s5] sm:$0x1]
        %v1430 = vperm.slane %v1428, 0
        %v1448 = vunpack.c.l.b16 %v1412
        %v1449 = vunpack.c.l.b16 %v1413
        %v1450 = vunpack.c.l.b16 %v1414
        %v1451 = vunpack.c.l.b16 %v1415
        %v1452 = vunpack.c.l.b16 %v1416
        %v1453 = vunpack.c.l.b16 %v1417
        %v1454 = vunpack.c.l.b16 %v1418
        %v1455 = vunpack.c.l.b16 %v1419
        %v1456 = vunpack.c.l.b16 %v1420
        %v1457 = vunpack.c.l.b16 %v1421
        %v1458 = vunpack.c.l.b16 %v1422
        %v1459 = vunpack.c.l.b16 %v1423
        %v1460 = vunpack.c.l.b16 %v1424
        %v1461 = vunpack.c.l.b16 %v1425
        %v1462 = vunpack.c.l.b16 %v1426
        %v1463 = vunpack.c.l.b16 %v1427
        %v1464 = vpack.c.b16 %v1449, %v1448
        %v1465 = vpack.c.b16 %v1451, %v1450
        %v1466 = vpack.c.b16 %v1453, %v1452
        %v1467 = vpack.c.b16 %v1455, %v1454
        %v1468 = vpack.c.b16 %v1457, %v1456
        %v1469 = vpack.c.b16 %v1459, %v1458
        %v1470 = vpack.c.b16 %v1461, %v1460
        %v1471 = vpack.c.b16 %v1463, %v1462
        %1480 = vmatpush.bf16.msra.mxu0 %v1471
        %1481 = vmatpush.bf16.msra.mxu0 %v1470
        %1482 = vmatpush.bf16.msra.mxu0 %v1469
        %1483 = vmatpush.bf16.msra.mxu0 %v1468
        %1484 = vmatpush.bf16.msra.mxu0 %v1467
        %1485 = vmatpush.bf16.msra.mxu0 %v1466
        %1486 = vmatpush.bf16.msra.mxu0 %v1465
        %1487 = vmatpush.bf16.msra.mxu0 %v1464
        %1488 = vmatmul.bf16.gmra.mxu0 %v1396
        %v1489 = vpop.f32.mrf.mxu0
        %v1490 = vadd.f32 %v1430, %v1489
        %v1491 = vpop.f32.mrf.mxu0
        %v1492 = vadd.f32 %v1430, %v1491
        %1493 = vmatmul.bf16.gmra.mxu0 %v1397
        %v1494 = vpop.f32.mrf.mxu0
        %v1495 = vadd.f32 %v1430, %v1494
        %v1496 = vpop.f32.mrf.mxu0
        %v1497 = vadd.f32 %v1430, %v1496
        %1498 = vmatmul.bf16.gmra.mxu0 %v1398
        %v1499 = vpop.f32.mrf.mxu0
        %v1500 = vadd.f32 %v1430, %v1499
        %v1501 = vpop.f32.mrf.mxu0
        %v1502 = vadd.f32 %v1430, %v1501
        %1503 = vmatmul.bf16.gmra.mxu0 %v1399
        %v1504 = vpop.f32.mrf.mxu0
        %v1505 = vadd.f32 %v1430, %v1504
        %v1506 = vpop.f32.mrf.mxu0
        %v1507 = vadd.f32 %v1430, %v1506
        %1508 = vmatmul.bf16.gmra.mxu0 %v1400
        %v1509 = vpop.f32.mrf.mxu0
        %v1510 = vadd.f32 %v1430, %v1509
        %v1511 = vpop.f32.mrf.mxu0
        %v1512 = vadd.f32 %v1430, %v1511
        %1513 = vmatmul.bf16.gmra.mxu0 %v1401
        %v1514 = vpop.f32.mrf.mxu0
        %v1515 = vadd.f32 %v1430, %v1514
        %v1516 = vpop.f32.mrf.mxu0
        %v1517 = vadd.f32 %v1430, %v1516
        %1518 = vmatmul.bf16.gmra.mxu0 %v1402
        %v1519 = vpop.f32.mrf.mxu0
        %v1520 = vadd.f32 %v1430, %v1519
        %v1521 = vpop.f32.mrf.mxu0
        %v1522 = vadd.f32 %v1430, %v1521
        %1523 = vmatmul.bf16.gmra.mxu0 %v1403
        %v1524 = vpop.f32.mrf.mxu0
        %v1525 = vadd.f32 %v1430, %v1524
        %v1526 = vpop.f32.mrf.mxu0
        %v1527 = vadd.f32 %v1430, %v1526
        %1528 = vmatmul.bf16.gmra.mxu0 %v1404
        %v1529 = vpop.f32.mrf.mxu0
        %v1530 = vadd.f32 %v1430, %v1529
        %v1531 = vpop.f32.mrf.mxu0
        %v1532 = vadd.f32 %v1430, %v1531
        %1533 = vmatmul.bf16.gmra.mxu0 %v1405
        %v1534 = vpop.f32.mrf.mxu0
        %v1535 = vadd.f32 %v1430, %v1534
        %v1536 = vpop.f32.mrf.mxu0
        %v1537 = vadd.f32 %v1430, %v1536
        %1538 = vmatmul.bf16.gmra.mxu0 %v1406
        %v1539 = vpop.f32.mrf.mxu0
        %v1540 = vadd.f32 %v1430, %v1539
        %v1541 = vpop.f32.mrf.mxu0
        %v1542 = vadd.f32 %v1430, %v1541
        %1543 = vmatmul.bf16.gmra.mxu0 %v1407
        %v1544 = vpop.f32.mrf.mxu0
        %v1545 = vadd.f32 %v1430, %v1544
        %v1546 = vpop.f32.mrf.mxu0
        %v1547 = vadd.f32 %v1430, %v1546
        %1548 = vmatmul.bf16.gmra.mxu0 %v1408
        %v1549 = vpop.f32.mrf.mxu0
        %v1550 = vadd.f32 %v1430, %v1549
        %v1551 = vpop.f32.mrf.mxu0
        %v1552 = vadd.f32 %v1430, %v1551
        %1553 = vmatmul.bf16.gmra.mxu0 %v1409
        %v1554 = vpop.f32.mrf.mxu0
        %v1555 = vadd.f32 %v1430, %v1554
        %v1556 = vpop.f32.mrf.mxu0
        %v1557 = vadd.f32 %v1430, %v1556
        %1558 = vmatmul.bf16.gmra.mxu0 %v1410
        %v1559 = vpop.f32.mrf.mxu0
        %v1560 = vadd.f32 %v1430, %v1559
        %v1561 = vpop.f32.mrf.mxu0
        %v1562 = vadd.f32 %v1430, %v1561
        %1563 = vmatmul.bf16.gmra.mxu0 %v1411
        %v1564 = vpop.f32.mrf.mxu0
        %v1565 = vadd.f32 %v1430, %v1564
        %v1566 = vpop.f32.mrf.mxu0
        %v1567 = vadd.f32 %v1430, %v1566
        %1568 = vdwg.mxu0
        %v1569 = vmax.f32 %v1490, 0.0
        %v1570 = vmax.f32 %v1492, 0.0
        %v1571 = vmax.f32 %v1495, 0.0
        %v1572 = vmax.f32 %v1497, 0.0
        %v1573 = vmax.f32 %v1500, 0.0
        %v1574 = vmax.f32 %v1502, 0.0
        %v1575 = vmax.f32 %v1505, 0.0
        %v1576 = vmax.f32 %v1507, 0.0
        %v1577 = vmax.f32 %v1510, 0.0
        %v1578 = vmax.f32 %v1512, 0.0
        %v1579 = vmax.f32 %v1515, 0.0
        %v1580 = vmax.f32 %v1517, 0.0
        %v1581 = vmax.f32 %v1520, 0.0
        %v1582 = vmax.f32 %v1522, 0.0
        %v1583 = vmax.f32 %v1525, 0.0
        %v1584 = vmax.f32 %v1527, 0.0
        %v1585 = vmax.f32 %v1530, 0.0
        %v1586 = vmax.f32 %v1532, 0.0
        %v1587 = vmax.f32 %v1535, 0.0
        %v1588 = vmax.f32 %v1537, 0.0
        %v1589 = vmax.f32 %v1540, 0.0
        %v1590 = vmax.f32 %v1542, 0.0
        %v1591 = vmax.f32 %v1545, 0.0
        %v1592 = vmax.f32 %v1547, 0.0
        %v1593 = vmax.f32 %v1550, 0.0
        %v1594 = vmax.f32 %v1552, 0.0
        %v1595 = vmax.f32 %v1555, 0.0
        %v1596 = vmax.f32 %v1557, 0.0
        %v1597 = vmax.f32 %v1560, 0.0
        %v1598 = vmax.f32 %v1562, 0.0
        %v1599 = vmax.f32 %v1565, 0.0
        %v1600 = vmax.f32 %v1567, 0.0
        %v1601 = vpack.c.bf16 %v1570, %v1569
        %v1602 = vpack.c.bf16 %v1572, %v1571
        %v1603 = vpack.c.bf16 %v1574, %v1573
        %v1604 = vpack.c.bf16 %v1576, %v1575
        %v1605 = vpack.c.bf16 %v1578, %v1577
        %v1606 = vpack.c.bf16 %v1580, %v1579
        %v1607 = vpack.c.bf16 %v1582, %v1581
        %v1608 = vpack.c.bf16 %v1584, %v1583
        %v1609 = vpack.c.bf16 %v1586, %v1585
        %v1610 = vpack.c.bf16 %v1588, %v1587
        %v1611 = vpack.c.bf16 %v1590, %v1589
        %v1612 = vpack.c.bf16 %v1592, %v1591
        %v1613 = vpack.c.bf16 %v1594, %v1593
        %v1614 = vpack.c.bf16 %v1596, %v1595
        %v1615 = vpack.c.bf16 %v1598, %v1597
        %v1616 = vpack.c.bf16 %v1600, %v1599
        %1617 = vmatpush.bf16.msra.mxu0 %v1608
        %1618 = vmatpush.bf16.msra.mxu0 %v1607
        %1619 = vmatpush.bf16.msra.mxu0 %v1606
        %1620 = vmatpush.bf16.msra.mxu0 %v1605
        %1621 = vmatpush.bf16.msra.mxu0 %v1604
        %1622 = vmatpush.bf16.msra.mxu0 %v1603
        %1623 = vmatpush.bf16.msra.mxu0 %v1602
        %1624 = vmatpush.bf16.msra.mxu0 %v1601
        %1625 = vmatmul.bf16.gmra.mxu0 %v821
        %v1626 = vpop.f32.mrf.mxu0
        %v1627 = vadd.f32 0.0, %v1626
        %v1628 = vpop.f32.mrf.mxu0
        %v1629 = vadd.f32 0.0, %v1628
        %1630 = vmatmul.bf16.gmra.mxu0 %v823
        %v1631 = vpop.f32.mrf.mxu0
        %v1632 = vadd.f32 0.0, %v1631
        %v1633 = vpop.f32.mrf.mxu0
        %v1634 = vadd.f32 0.0, %v1633
        %1635 = vmatmul.bf16.gmra.mxu0 %v825
        %v1636 = vpop.f32.mrf.mxu0
        %v1637 = vadd.f32 0.0, %v1636
        %v1638 = vpop.f32.mrf.mxu0
        %v1639 = vadd.f32 0.0, %v1638
        %1640 = vmatmul.bf16.gmra.mxu0 %v827
        %v1641 = vpop.f32.mrf.mxu0
        %v1642 = vadd.f32 0.0, %v1641
        %v1643 = vpop.f32.mrf.mxu0
        %v1644 = vadd.f32 0.0, %v1643
        %1645 = vmatmul.bf16.gmra.mxu0 %v829
        %v1646 = vpop.f32.mrf.mxu0
        %v1647 = vadd.f32 0.0, %v1646
        %v1648 = vpop.f32.mrf.mxu0
        %v1649 = vadd.f32 0.0, %v1648
        %1650 = vmatmul.bf16.gmra.mxu0 %v831
        %v1651 = vpop.f32.mrf.mxu0
        %v1652 = vadd.f32 0.0, %v1651
        %v1653 = vpop.f32.mrf.mxu0
        %v1654 = vadd.f32 0.0, %v1653
        %1655 = vmatmul.bf16.gmra.mxu0 %v833
        %v1656 = vpop.f32.mrf.mxu0
        %v1657 = vadd.f32 0.0, %v1656
        %v1658 = vpop.f32.mrf.mxu0
        %v1659 = vadd.f32 0.0, %v1658
        %1660 = vmatmul.bf16.gmra.mxu0 %v835
        %v1661 = vpop.f32.mrf.mxu0
        %v1662 = vadd.f32 0.0, %v1661
        %v1663 = vpop.f32.mrf.mxu0
        %v1664 = vadd.f32 0.0, %v1663
        %1665 = vmatmul.bf16.gmra.mxu0 %v837
        %v1666 = vpop.f32.mrf.mxu0
        %v1667 = vadd.f32 0.0, %v1666
        %v1668 = vpop.f32.mrf.mxu0
        %v1669 = vadd.f32 0.0, %v1668
        %1670 = vmatmul.bf16.gmra.mxu0 %v839
        %v1671 = vpop.f32.mrf.mxu0
        %v1672 = vadd.f32 0.0, %v1671
        %v1673 = vpop.f32.mrf.mxu0
        %v1674 = vadd.f32 0.0, %v1673
        %1675 = vmatmul.bf16.gmra.mxu0 %v841
        %v1676 = vpop.f32.mrf.mxu0
        %v1677 = vadd.f32 0.0, %v1676
        %v1678 = vpop.f32.mrf.mxu0
        %v1679 = vadd.f32 0.0, %v1678
        %1680 = vmatmul.bf16.gmra.mxu0 %v843
        %v1681 = vpop.f32.mrf.mxu0
        %v1682 = vadd.f32 0.0, %v1681
        %v1683 = vpop.f32.mrf.mxu0
        %v1684 = vadd.f32 0.0, %v1683
        %1685 = vmatmul.bf16.gmra.mxu0 %v845
        %v1686 = vpop.f32.mrf.mxu0
        %v1687 = vadd.f32 0.0, %v1686
        %v1688 = vpop.f32.mrf.mxu0
        %v1689 = vadd.f32 0.0, %v1688
        %1690 = vmatmul.bf16.gmra.mxu0 %v847
        %v1691 = vpop.f32.mrf.mxu0
        %v1692 = vadd.f32 0.0, %v1691
        %v1693 = vpop.f32.mrf.mxu0
        %v1694 = vadd.f32 0.0, %v1693
        %1695 = vmatmul.bf16.gmra.mxu0 %v849
        %v1696 = vpop.f32.mrf.mxu0
        %v1697 = vadd.f32 0.0, %v1696
        %v1698 = vpop.f32.mrf.mxu0
        %v1699 = vadd.f32 0.0, %v1698
        %1700 = vmatmul.bf16.gmra.mxu0 %v851
        %v1701 = vpop.f32.mrf.mxu0
        %v1702 = vadd.f32 0.0, %v1701
        %v1703 = vpop.f32.mrf.mxu0
        %v1704 = vadd.f32 0.0, %v1703
        %1705 = vdwg.mxu0
        %1706 = vmatpush.bf16.msra.mxu0 %v1616
        %1707 = vmatpush.bf16.msra.mxu0 %v1615
        %1708 = vmatpush.bf16.msra.mxu0 %v1614
        %1709 = vmatpush.bf16.msra.mxu0 %v1613
        %1710 = vmatpush.bf16.msra.mxu0 %v1612
        %1711 = vmatpush.bf16.msra.mxu0 %v1611
        %1712 = vmatpush.bf16.msra.mxu0 %v1610
        %1713 = vmatpush.bf16.msra.mxu0 %v1609
        %1714 = vmatmul.bf16.gmra.mxu0 %v822
        %v1715 = vpop.f32.mrf.mxu0
        %v1716 = vadd.f32 %v1627, %v1715
        %v1717 = vpop.f32.mrf.mxu0
        %v1718 = vadd.f32 %v1629, %v1717
        %1719 = vmatmul.bf16.gmra.mxu0 %v824
        %v1720 = vpop.f32.mrf.mxu0
        %v1721 = vadd.f32 %v1632, %v1720
        %v1722 = vpop.f32.mrf.mxu0
        %v1723 = vadd.f32 %v1634, %v1722
        %1724 = vmatmul.bf16.gmra.mxu0 %v826
        %v1725 = vpop.f32.mrf.mxu0
        %v1726 = vadd.f32 %v1637, %v1725
        %v1727 = vpop.f32.mrf.mxu0
        %v1728 = vadd.f32 %v1639, %v1727
        %1729 = vmatmul.bf16.gmra.mxu0 %v828
        %v1730 = vpop.f32.mrf.mxu0
        %v1731 = vadd.f32 %v1642, %v1730
        %v1732 = vpop.f32.mrf.mxu0
        %v1733 = vadd.f32 %v1644, %v1732
        %1734 = vmatmul.bf16.gmra.mxu0 %v830
        %v1735 = vpop.f32.mrf.mxu0
        %v1736 = vadd.f32 %v1647, %v1735
        %v1737 = vpop.f32.mrf.mxu0
        %v1738 = vadd.f32 %v1649, %v1737
        %1739 = vmatmul.bf16.gmra.mxu0 %v832
        %v1740 = vpop.f32.mrf.mxu0
        %v1741 = vadd.f32 %v1652, %v1740
        %v1742 = vpop.f32.mrf.mxu0
        %v1743 = vadd.f32 %v1654, %v1742
        %1744 = vmatmul.bf16.gmra.mxu0 %v834
        %v1745 = vpop.f32.mrf.mxu0
        %v1746 = vadd.f32 %v1657, %v1745
        %v1747 = vpop.f32.mrf.mxu0
        %v1748 = vadd.f32 %v1659, %v1747
        %1749 = vmatmul.bf16.gmra.mxu0 %v836
        %v1750 = vpop.f32.mrf.mxu0
        %v1751 = vadd.f32 %v1662, %v1750
        %v1752 = vpop.f32.mrf.mxu0
        %v1753 = vadd.f32 %v1664, %v1752
        %1754 = vmatmul.bf16.gmra.mxu0 %v838
        %v1755 = vpop.f32.mrf.mxu0
        %v1756 = vadd.f32 %v1667, %v1755
        %v1757 = vpop.f32.mrf.mxu0
        %v1758 = vadd.f32 %v1669, %v1757
        %1759 = vmatmul.bf16.gmra.mxu0 %v840
        %v1760 = vpop.f32.mrf.mxu0
        %v1761 = vadd.f32 %v1672, %v1760
        %v1762 = vpop.f32.mrf.mxu0
        %v1763 = vadd.f32 %v1674, %v1762
        %1764 = vmatmul.bf16.gmra.mxu0 %v842
        %v1765 = vpop.f32.mrf.mxu0
        %v1766 = vadd.f32 %v1677, %v1765
        %v1767 = vpop.f32.mrf.mxu0
        %v1768 = vadd.f32 %v1679, %v1767
        %1769 = vmatmul.bf16.gmra.mxu0 %v844
        %v1770 = vpop.f32.mrf.mxu0
        %v1771 = vadd.f32 %v1682, %v1770
        %v1772 = vpop.f32.mrf.mxu0
        %v1773 = vadd.f32 %v1684, %v1772
        %1774 = vmatmul.bf16.gmra.mxu0 %v846
        %v1775 = vpop.f32.mrf.mxu0
        %v1776 = vadd.f32 %v1687, %v1775
        %v1777 = vpop.f32.mrf.mxu0
        %v1778 = vadd.f32 %v1689, %v1777
        %1779 = vmatmul.bf16.gmra.mxu0 %v848
        %v1780 = vpop.f32.mrf.mxu0
        %v1781 = vadd.f32 %v1692, %v1780
        %v1782 = vpop.f32.mrf.mxu0
        %v1783 = vadd.f32 %v1694, %v1782
        %1784 = vmatmul.bf16.gmra.mxu0 %v850
        %v1785 = vpop.f32.mrf.mxu0
        %v1786 = vadd.f32 %v1697, %v1785
        %v1787 = vpop.f32.mrf.mxu0
        %v1788 = vadd.f32 %v1699, %v1787
        %1789 = vmatmul.bf16.gmra.mxu0 %v852
        %v1790 = vpop.f32.mrf.mxu0
        %v1791 = vadd.f32 %v1702, %v1790
        %v1792 = vpop.f32.mrf.mxu0
        %v1793 = vadd.f32 %v1704, %v1792
        %1794 = vdwg.mxu0
        %v1795 = vadd.f32 %v1569, %v1716
        %v1796 = vadd.f32 %v1570, %v1718
        %v1797 = vadd.f32 %v1571, %v1721
        %v1798 = vadd.f32 %v1572, %v1723
        %v1799 = vadd.f32 %v1573, %v1726
        %v1800 = vadd.f32 %v1574, %v1728
        %v1801 = vadd.f32 %v1575, %v1731
        %v1802 = vadd.f32 %v1576, %v1733
        %v1803 = vadd.f32 %v1577, %v1736
        %v1804 = vadd.f32 %v1578, %v1738
        %v1805 = vadd.f32 %v1579, %v1741
        %v1806 = vadd.f32 %v1580, %v1743
        %v1807 = vadd.f32 %v1581, %v1746
        %v1808 = vadd.f32 %v1582, %v1748
        %v1809 = vadd.f32 %v1583, %v1751
        %v1810 = vadd.f32 %v1584, %v1753
        %v1811 = vadd.f32 %v1585, %v1756
        %v1812 = vadd.f32 %v1586, %v1758
        %v1813 = vadd.f32 %v1587, %v1761
        %v1814 = vadd.f32 %v1588, %v1763
        %v1815 = vadd.f32 %v1589, %v1766
        %v1816 = vadd.f32 %v1590, %v1768
        %v1817 = vadd.f32 %v1591, %v1771
        %v1818 = vadd.f32 %v1592, %v1773
        %v1819 = vadd.f32 %v1593, %v1776
        %v1820 = vadd.f32 %v1594, %v1778
        %v1821 = vadd.f32 %v1595, %v1781
        %v1822 = vadd.f32 %v1596, %v1783
        %v1823 = vadd.f32 %v1597, %v1786
        %v1824 = vadd.f32 %v1598, %v1788
        %v1825 = vadd.f32 %v1599, %v1791
        %v1826 = vadd.f32 %v1600, %v1793
        %v1827 = vpack.c.bf16 %v1796, %v1795
        %v1828 = vpack.c.bf16 %v1798, %v1797
        %v1829 = vpack.c.bf16 %v1800, %v1799
        %v1830 = vpack.c.bf16 %v1802, %v1801
        %v1831 = vpack.c.bf16 %v1804, %v1803
        %v1832 = vpack.c.bf16 %v1806, %v1805
        %v1833 = vpack.c.bf16 %v1808, %v1807
        %v1834 = vpack.c.bf16 %v1810, %v1809
        %v1835 = vpack.c.bf16 %v1812, %v1811
        %v1836 = vpack.c.bf16 %v1814, %v1813
        %v1837 = vpack.c.bf16 %v1816, %v1815
        %v1838 = vpack.c.bf16 %v1818, %v1817
        %v1839 = vpack.c.bf16 %v1820, %v1819
        %v1840 = vpack.c.bf16 %v1822, %v1821
        %v1841 = vpack.c.bf16 %v1824, %v1823
        %v1842 = vpack.c.bf16 %v1826, %v1825
        %v1843 = vld [vmem:[#allocation10] sm:$0xf]
        %v1844 = vld [vmem:[#allocation10 + $0x4] sm:$0xf]
        %v1845 = vld [vmem:[#allocation10 + $0x8] sm:$0xf]
        %v1846 = vld [vmem:[#allocation10 + $0xc] sm:$0xf]
        %v1847 = vld [vmem:[#allocation10 + $0x10] sm:$0xf]
        %v1848 = vld [vmem:[#allocation10 + $0x14] sm:$0xf]
        %v1849 = vld [vmem:[#allocation10 + $0x18] sm:$0xf]
        %v1850 = vld [vmem:[#allocation10 + $0x1c] sm:$0xf]
        %v1851 = vld [vmem:[#allocation10 + $0x20] sm:$0xf]
        %v1852 = vld [vmem:[#allocation10 + $0x24] sm:$0xf]
        %v1853 = vld [vmem:[#allocation10 + $0x28] sm:$0xf]
        %v1854 = vld [vmem:[#allocation10 + $0x2c] sm:$0xf]
        %v1855 = vld [vmem:[#allocation10 + $0x30] sm:$0xf]
        %v1856 = vld [vmem:[#allocation10 + $0x34] sm:$0xf]
        %v1857 = vld [vmem:[#allocation10 + $0x38] sm:$0xf]
        %v1858 = vld [vmem:[#allocation10 + $0x3c] sm:$0xf]
        %v1859 = vld [vmem:[%s7] sm:$0x1]
        %v1861 = vperm.slane %v1859, 0
        %v1879 = vunpack.c.l.b16 %v1843
        %v1880 = vunpack.c.l.b16 %v1844
        %v1881 = vunpack.c.l.b16 %v1845
        %v1882 = vunpack.c.l.b16 %v1846
        %v1883 = vunpack.c.l.b16 %v1847
        %v1884 = vunpack.c.l.b16 %v1848
        %v1885 = vunpack.c.l.b16 %v1849
        %v1886 = vunpack.c.l.b16 %v1850
        %v1887 = vunpack.c.l.b16 %v1851
        %v1888 = vunpack.c.l.b16 %v1852
        %v1889 = vunpack.c.l.b16 %v1853
        %v1890 = vunpack.c.l.b16 %v1854
        %v1891 = vunpack.c.l.b16 %v1855
        %v1892 = vunpack.c.l.b16 %v1856
        %v1893 = vunpack.c.l.b16 %v1857
        %v1894 = vunpack.c.l.b16 %v1858
        %v1895 = vpack.c.b16 %v1880, %v1879
        %v1896 = vpack.c.b16 %v1882, %v1881
        %v1897 = vpack.c.b16 %v1884, %v1883
        %v1898 = vpack.c.b16 %v1886, %v1885
        %v1899 = vpack.c.b16 %v1888, %v1887
        %v1900 = vpack.c.b16 %v1890, %v1889
        %v1901 = vpack.c.b16 %v1892, %v1891
        %v1902 = vpack.c.b16 %v1894, %v1893
        %1911 = vmatpush.bf16.msra.mxu0 %v1902
        %1912 = vmatpush.bf16.msra.mxu0 %v1901
        %1913 = vmatpush.bf16.msra.mxu0 %v1900
        %1914 = vmatpush.bf16.msra.mxu0 %v1899
        %1915 = vmatpush.bf16.msra.mxu0 %v1898
        %1916 = vmatpush.bf16.msra.mxu0 %v1897
        %1917 = vmatpush.bf16.msra.mxu0 %v1896
        %1918 = vmatpush.bf16.msra.mxu0 %v1895
        %1919 = vmatmul.bf16.gmra.mxu0 %v1827
        %v1920 = vpop.f32.mrf.mxu0
        %v1921 = vadd.f32 %v1861, %v1920
        %v1922 = vpop.f32.mrf.mxu0
        %v1923 = vadd.f32 %v1861, %v1922
        %1924 = vmatmul.bf16.gmra.mxu0 %v1828
        %v1925 = vpop.f32.mrf.mxu0
        %v1926 = vadd.f32 %v1861, %v1925
        %v1927 = vpop.f32.mrf.mxu0
        %v1928 = vadd.f32 %v1861, %v1927
        %1929 = vmatmul.bf16.gmra.mxu0 %v1829
        %v1930 = vpop.f32.mrf.mxu0
        %v1931 = vadd.f32 %v1861, %v1930
        %v1932 = vpop.f32.mrf.mxu0
        %v1933 = vadd.f32 %v1861, %v1932
        %1934 = vmatmul.bf16.gmra.mxu0 %v1830
        %v1935 = vpop.f32.mrf.mxu0
        %v1936 = vadd.f32 %v1861, %v1935
        %v1937 = vpop.f32.mrf.mxu0
        %v1938 = vadd.f32 %v1861, %v1937
        %1939 = vmatmul.bf16.gmra.mxu0 %v1831
        %v1940 = vpop.f32.mrf.mxu0
        %v1941 = vadd.f32 %v1861, %v1940
        %v1942 = vpop.f32.mrf.mxu0
        %v1943 = vadd.f32 %v1861, %v1942
        %1944 = vmatmul.bf16.gmra.mxu0 %v1832
        %v1945 = vpop.f32.mrf.mxu0
        %v1946 = vadd.f32 %v1861, %v1945
        %v1947 = vpop.f32.mrf.mxu0
        %v1948 = vadd.f32 %v1861, %v1947
        %1949 = vmatmul.bf16.gmra.mxu0 %v1833
        %v1950 = vpop.f32.mrf.mxu0
        %v1951 = vadd.f32 %v1861, %v1950
        %v1952 = vpop.f32.mrf.mxu0
        %v1953 = vadd.f32 %v1861, %v1952
        %1954 = vmatmul.bf16.gmra.mxu0 %v1834
        %v1955 = vpop.f32.mrf.mxu0
        %v1956 = vadd.f32 %v1861, %v1955
        %v1957 = vpop.f32.mrf.mxu0
        %v1958 = vadd.f32 %v1861, %v1957
        %1959 = vmatmul.bf16.gmra.mxu0 %v1835
        %v1960 = vpop.f32.mrf.mxu0
        %v1961 = vadd.f32 %v1861, %v1960
        %v1962 = vpop.f32.mrf.mxu0
        %v1963 = vadd.f32 %v1861, %v1962
        %1964 = vmatmul.bf16.gmra.mxu0 %v1836
        %v1965 = vpop.f32.mrf.mxu0
        %v1966 = vadd.f32 %v1861, %v1965
        %v1967 = vpop.f32.mrf.mxu0
        %v1968 = vadd.f32 %v1861, %v1967
        %1969 = vmatmul.bf16.gmra.mxu0 %v1837
        %v1970 = vpop.f32.mrf.mxu0
        %v1971 = vadd.f32 %v1861, %v1970
        %v1972 = vpop.f32.mrf.mxu0
        %v1973 = vadd.f32 %v1861, %v1972
        %1974 = vmatmul.bf16.gmra.mxu0 %v1838
        %v1975 = vpop.f32.mrf.mxu0
        %v1976 = vadd.f32 %v1861, %v1975
        %v1977 = vpop.f32.mrf.mxu0
        %v1978 = vadd.f32 %v1861, %v1977
        %1979 = vmatmul.bf16.gmra.mxu0 %v1839
        %v1980 = vpop.f32.mrf.mxu0
        %v1981 = vadd.f32 %v1861, %v1980
        %v1982 = vpop.f32.mrf.mxu0
        %v1983 = vadd.f32 %v1861, %v1982
        %1984 = vmatmul.bf16.gmra.mxu0 %v1840
        %v1985 = vpop.f32.mrf.mxu0
        %v1986 = vadd.f32 %v1861, %v1985
        %v1987 = vpop.f32.mrf.mxu0
        %v1988 = vadd.f32 %v1861, %v1987
        %1989 = vmatmul.bf16.gmra.mxu0 %v1841
        %v1990 = vpop.f32.mrf.mxu0
        %v1991 = vadd.f32 %v1861, %v1990
        %v1992 = vpop.f32.mrf.mxu0
        %v1993 = vadd.f32 %v1861, %v1992
        %1994 = vmatmul.bf16.gmra.mxu0 %v1842
        %v1995 = vpop.f32.mrf.mxu0
        %v1996 = vadd.f32 %v1861, %v1995
        %v1997 = vpop.f32.mrf.mxu0
        %v1998 = vadd.f32 %v1861, %v1997
        %1999 = vdwg.mxu0
        %v2000 = vmax.f32 %v1921, 0.0
        %v2001 = vmax.f32 %v1923, 0.0
        %v2002 = vmax.f32 %v1926, 0.0
        %v2003 = vmax.f32 %v1928, 0.0
        %v2004 = vmax.f32 %v1931, 0.0
        %v2005 = vmax.f32 %v1933, 0.0
        %v2006 = vmax.f32 %v1936, 0.0
        %v2007 = vmax.f32 %v1938, 0.0
        %v2008 = vmax.f32 %v1941, 0.0
        %v2009 = vmax.f32 %v1943, 0.0
        %v2010 = vmax.f32 %v1946, 0.0
        %v2011 = vmax.f32 %v1948, 0.0
        %v2012 = vmax.f32 %v1951, 0.0
        %v2013 = vmax.f32 %v1953, 0.0
        %v2014 = vmax.f32 %v1956, 0.0
        %v2015 = vmax.f32 %v1958, 0.0
        %v2016 = vmax.f32 %v1961, 0.0
        %v2017 = vmax.f32 %v1963, 0.0
        %v2018 = vmax.f32 %v1966, 0.0
        %v2019 = vmax.f32 %v1968, 0.0
        %v2020 = vmax.f32 %v1971, 0.0
        %v2021 = vmax.f32 %v1973, 0.0
        %v2022 = vmax.f32 %v1976, 0.0
        %v2023 = vmax.f32 %v1978, 0.0
        %v2024 = vmax.f32 %v1981, 0.0
        %v2025 = vmax.f32 %v1983, 0.0
        %v2026 = vmax.f32 %v1986, 0.0
        %v2027 = vmax.f32 %v1988, 0.0
        %v2028 = vmax.f32 %v1991, 0.0
        %v2029 = vmax.f32 %v1993, 0.0
        %v2030 = vmax.f32 %v1996, 0.0
        %v2031 = vmax.f32 %v1998, 0.0
        %v2032 = vpack.c.bf16 %v2001, %v2000
        %v2033 = vpack.c.bf16 %v2003, %v2002
        %v2034 = vpack.c.bf16 %v2005, %v2004
        %v2035 = vpack.c.bf16 %v2007, %v2006
        %v2036 = vpack.c.bf16 %v2009, %v2008
        %v2037 = vpack.c.bf16 %v2011, %v2010
        %v2038 = vpack.c.bf16 %v2013, %v2012
        %v2039 = vpack.c.bf16 %v2015, %v2014
        %v2040 = vpack.c.bf16 %v2017, %v2016
        %v2041 = vpack.c.bf16 %v2019, %v2018
        %v2042 = vpack.c.bf16 %v2021, %v2020
        %v2043 = vpack.c.bf16 %v2023, %v2022
        %v2044 = vpack.c.bf16 %v2025, %v2024
        %v2045 = vpack.c.bf16 %v2027, %v2026
        %v2046 = vpack.c.bf16 %v2029, %v2028
        %v2047 = vpack.c.bf16 %v2031, %v2030
        %v2048 = vld [vmem:[#allocation11] sm:$0xf]
        %v2049 = vld [vmem:[#allocation11 + $0x4] sm:$0xf]
        %v2050 = vld [vmem:[#allocation11 + $0x8] sm:$0xf]
        %v2051 = vld [vmem:[#allocation11 + $0xc] sm:$0xf]
        %v2052 = vld [vmem:[#allocation11 + $0x10] sm:$0xf]
        %v2053 = vld [vmem:[#allocation11 + $0x14] sm:$0xf]
        %v2054 = vld [vmem:[#allocation11 + $0x18] sm:$0xf]
        %v2055 = vld [vmem:[#allocation11 + $0x1c] sm:$0xf]
        %v2056 = vld [vmem:[#allocation11 + $0x20] sm:$0xf]
        %v2057 = vld [vmem:[#allocation11 + $0x24] sm:$0xf]
        %v2058 = vld [vmem:[#allocation11 + $0x28] sm:$0xf]
        %v2059 = vld [vmem:[#allocation11 + $0x2c] sm:$0xf]
        %v2060 = vld [vmem:[#allocation11 + $0x30] sm:$0xf]
        %v2061 = vld [vmem:[#allocation11 + $0x34] sm:$0xf]
        %v2062 = vld [vmem:[#allocation11 + $0x38] sm:$0xf]
        %v2063 = vld [vmem:[#allocation11 + $0x3c] sm:$0xf]
        %v2064 = vld [vmem:[%s9] sm:$0x1]
        %v2066 = vperm.slane %v2064, 0
        %v2084 = vunpack.c.l.b16 %v2048
        %v2085 = vunpack.c.l.b16 %v2049
        %v2086 = vunpack.c.l.b16 %v2050
        %v2087 = vunpack.c.l.b16 %v2051
        %v2088 = vunpack.c.l.b16 %v2052
        %v2089 = vunpack.c.l.b16 %v2053
        %v2090 = vunpack.c.l.b16 %v2054
        %v2091 = vunpack.c.l.b16 %v2055
        %v2092 = vunpack.c.l.b16 %v2056
        %v2093 = vunpack.c.l.b16 %v2057
        %v2094 = vunpack.c.l.b16 %v2058
        %v2095 = vunpack.c.l.b16 %v2059
        %v2096 = vunpack.c.l.b16 %v2060
        %v2097 = vunpack.c.l.b16 %v2061
        %v2098 = vunpack.c.l.b16 %v2062
        %v2099 = vunpack.c.l.b16 %v2063
        %v2100 = vpack.c.b16 %v2085, %v2084
        %v2101 = vpack.c.b16 %v2087, %v2086
        %v2102 = vpack.c.b16 %v2089, %v2088
        %v2103 = vpack.c.b16 %v2091, %v2090
        %v2104 = vpack.c.b16 %v2093, %v2092
        %v2105 = vpack.c.b16 %v2095, %v2094
        %v2106 = vpack.c.b16 %v2097, %v2096
        %v2107 = vpack.c.b16 %v2099, %v2098
        %2116 = vmatpush.bf16.msra.mxu0 %v2107
        %2117 = vmatpush.bf16.msra.mxu0 %v2106
        %2118 = vmatpush.bf16.msra.mxu0 %v2105
        %2119 = vmatpush.bf16.msra.mxu0 %v2104
        %2120 = vmatpush.bf16.msra.mxu0 %v2103
        %2121 = vmatpush.bf16.msra.mxu0 %v2102
        %2122 = vmatpush.bf16.msra.mxu0 %v2101
        %2123 = vmatpush.bf16.msra.mxu0 %v2100
        %2124 = vmatmul.bf16.gmra.mxu0 %v2032
        %v2125 = vpop.f32.mrf.mxu0
        %v2126 = vadd.f32 %v2066, %v2125
        %v2127 = vpop.f32.mrf.mxu0
        %v2128 = vadd.f32 %v2066, %v2127
        %2129 = vmatmul.bf16.gmra.mxu0 %v2033
        %v2130 = vpop.f32.mrf.mxu0
        %v2131 = vadd.f32 %v2066, %v2130
        %v2132 = vpop.f32.mrf.mxu0
        %v2133 = vadd.f32 %v2066, %v2132
        %2134 = vmatmul.bf16.gmra.mxu0 %v2034
        %v2135 = vpop.f32.mrf.mxu0
        %v2136 = vadd.f32 %v2066, %v2135
        %v2137 = vpop.f32.mrf.mxu0
        %v2138 = vadd.f32 %v2066, %v2137
        %2139 = vmatmul.bf16.gmra.mxu0 %v2035
        %v2140 = vpop.f32.mrf.mxu0
        %v2141 = vadd.f32 %v2066, %v2140
        %v2142 = vpop.f32.mrf.mxu0
        %v2143 = vadd.f32 %v2066, %v2142
        %2144 = vmatmul.bf16.gmra.mxu0 %v2036
        %v2145 = vpop.f32.mrf.mxu0
        %v2146 = vadd.f32 %v2066, %v2145
        %v2147 = vpop.f32.mrf.mxu0
        %v2148 = vadd.f32 %v2066, %v2147
        %2149 = vmatmul.bf16.gmra.mxu0 %v2037
        %v2150 = vpop.f32.mrf.mxu0
        %v2151 = vadd.f32 %v2066, %v2150
        %v2152 = vpop.f32.mrf.mxu0
        %v2153 = vadd.f32 %v2066, %v2152
        %2154 = vmatmul.bf16.gmra.mxu0 %v2038
        %v2155 = vpop.f32.mrf.mxu0
        %v2156 = vadd.f32 %v2066, %v2155
        %v2157 = vpop.f32.mrf.mxu0
        %v2158 = vadd.f32 %v2066, %v2157
        %2159 = vmatmul.bf16.gmra.mxu0 %v2039
        %v2160 = vpop.f32.mrf.mxu0
        %v2161 = vadd.f32 %v2066, %v2160
        %v2162 = vpop.f32.mrf.mxu0
        %v2163 = vadd.f32 %v2066, %v2162
        %2164 = vmatmul.bf16.gmra.mxu0 %v2040
        %v2165 = vpop.f32.mrf.mxu0
        %v2166 = vadd.f32 %v2066, %v2165
        %v2167 = vpop.f32.mrf.mxu0
        %v2168 = vadd.f32 %v2066, %v2167
        %2169 = vmatmul.bf16.gmra.mxu0 %v2041
        %v2170 = vpop.f32.mrf.mxu0
        %v2171 = vadd.f32 %v2066, %v2170
        %v2172 = vpop.f32.mrf.mxu0
        %v2173 = vadd.f32 %v2066, %v2172
        %2174 = vmatmul.bf16.gmra.mxu0 %v2042
        %v2175 = vpop.f32.mrf.mxu0
        %v2176 = vadd.f32 %v2066, %v2175
        %v2177 = vpop.f32.mrf.mxu0
        %v2178 = vadd.f32 %v2066, %v2177
        %2179 = vmatmul.bf16.gmra.mxu0 %v2043
        %v2180 = vpop.f32.mrf.mxu0
        %v2181 = vadd.f32 %v2066, %v2180
        %v2182 = vpop.f32.mrf.mxu0
        %v2183 = vadd.f32 %v2066, %v2182
        %2184 = vmatmul.bf16.gmra.mxu0 %v2044
        %v2185 = vpop.f32.mrf.mxu0
        %v2186 = vadd.f32 %v2066, %v2185
        %v2187 = vpop.f32.mrf.mxu0
        %v2188 = vadd.f32 %v2066, %v2187
        %2189 = vmatmul.bf16.gmra.mxu0 %v2045
        %v2190 = vpop.f32.mrf.mxu0
        %v2191 = vadd.f32 %v2066, %v2190
        %v2192 = vpop.f32.mrf.mxu0
        %v2193 = vadd.f32 %v2066, %v2192
        %2194 = vmatmul.bf16.gmra.mxu0 %v2046
        %v2195 = vpop.f32.mrf.mxu0
        %v2196 = vadd.f32 %v2066, %v2195
        %v2197 = vpop.f32.mrf.mxu0
        %v2198 = vadd.f32 %v2066, %v2197
        %2199 = vmatmul.bf16.gmra.mxu0 %v2047
        %v2200 = vpop.f32.mrf.mxu0
        %v2201 = vadd.f32 %v2066, %v2200
        %v2202 = vpop.f32.mrf.mxu0
        %v2203 = vadd.f32 %v2066, %v2202
        %2204 = vdwg.mxu0
        %v2205 = vmax.f32 %v2126, 0.0
        %v2206 = vmax.f32 %v2128, 0.0
        %v2207 = vmax.f32 %v2131, 0.0
        %v2208 = vmax.f32 %v2133, 0.0
        %v2209 = vmax.f32 %v2136, 0.0
        %v2210 = vmax.f32 %v2138, 0.0
        %v2211 = vmax.f32 %v2141, 0.0
        %v2212 = vmax.f32 %v2143, 0.0
        %v2213 = vmax.f32 %v2146, 0.0
        %v2214 = vmax.f32 %v2148, 0.0
        %v2215 = vmax.f32 %v2151, 0.0
        %v2216 = vmax.f32 %v2153, 0.0
        %v2217 = vmax.f32 %v2156, 0.0
        %v2218 = vmax.f32 %v2158, 0.0
        %v2219 = vmax.f32 %v2161, 0.0
        %v2220 = vmax.f32 %v2163, 0.0
        %v2221 = vmax.f32 %v2166, 0.0
        %v2222 = vmax.f32 %v2168, 0.0
        %v2223 = vmax.f32 %v2171, 0.0
        %v2224 = vmax.f32 %v2173, 0.0
        %v2225 = vmax.f32 %v2176, 0.0
        %v2226 = vmax.f32 %v2178, 0.0
        %v2227 = vmax.f32 %v2181, 0.0
        %v2228 = vmax.f32 %v2183, 0.0
        %v2229 = vmax.f32 %v2186, 0.0
        %v2230 = vmax.f32 %v2188, 0.0
        %v2231 = vmax.f32 %v2191, 0.0
        %v2232 = vmax.f32 %v2193, 0.0
        %v2233 = vmax.f32 %v2196, 0.0
        %v2234 = vmax.f32 %v2198, 0.0
        %v2235 = vmax.f32 %v2201, 0.0
        %v2236 = vmax.f32 %v2203, 0.0
        %v2237 = vpack.c.bf16 %v2206, %v2205
        %v2238 = vpack.c.bf16 %v2208, %v2207
        %v2239 = vpack.c.bf16 %v2210, %v2209
        %v2240 = vpack.c.bf16 %v2212, %v2211
        %v2241 = vpack.c.bf16 %v2214, %v2213
        %v2242 = vpack.c.bf16 %v2216, %v2215
        %v2243 = vpack.c.bf16 %v2218, %v2217
        %v2244 = vpack.c.bf16 %v2220, %v2219
        %v2245 = vpack.c.bf16 %v2222, %v2221
        %v2246 = vpack.c.bf16 %v2224, %v2223
        %v2247 = vpack.c.bf16 %v2226, %v2225
        %v2248 = vpack.c.bf16 %v2228, %v2227
        %v2249 = vpack.c.bf16 %v2230, %v2229
        %v2250 = vpack.c.bf16 %v2232, %v2231
        %v2251 = vpack.c.bf16 %v2234, %v2233
        %v2252 = vpack.c.bf16 %v2236, %v2235
        %v2253 = vld [vmem:[#allocation13] sm:$0xf]
        %v2254 = vld [vmem:[#allocation13 + $0x4] sm:$0xf]
        %v2255 = vld [vmem:[#allocation13 + $0x8] sm:$0xf]
        %v2256 = vld [vmem:[#allocation13 + $0xc] sm:$0xf]
        %v2257 = vld [vmem:[#allocation13 + $0x10] sm:$0xf]
        %v2258 = vld [vmem:[#allocation13 + $0x14] sm:$0xf]
        %v2259 = vld [vmem:[#allocation13 + $0x18] sm:$0xf]
        %v2260 = vld [vmem:[#allocation13 + $0x1c] sm:$0xf]
        %v2261 = vld [vmem:[#allocation13 + $0x20] sm:$0xf]
        %v2262 = vld [vmem:[#allocation13 + $0x24] sm:$0xf]
        %v2263 = vld [vmem:[#allocation13 + $0x28] sm:$0xf]
        %v2264 = vld [vmem:[#allocation13 + $0x2c] sm:$0xf]
        %v2265 = vld [vmem:[#allocation13 + $0x30] sm:$0xf]
        %v2266 = vld [vmem:[#allocation13 + $0x34] sm:$0xf]
        %v2267 = vld [vmem:[#allocation13 + $0x38] sm:$0xf]
        %v2268 = vld [vmem:[#allocation13 + $0x3c] sm:$0xf]
        %v2269 = vld [vmem:[%s11] sm:$0x1]
        %v2271 = vperm.slane %v2269, 0
        %v2289 = vunpack.c.l.b16 %v2253
        %v2290 = vunpack.c.l.b16 %v2254
        %v2291 = vunpack.c.l.b16 %v2255
        %v2292 = vunpack.c.l.b16 %v2256
        %v2293 = vunpack.c.l.b16 %v2257
        %v2294 = vunpack.c.l.b16 %v2258
        %v2295 = vunpack.c.l.b16 %v2259
        %v2296 = vunpack.c.l.b16 %v2260
        %v2297 = vunpack.c.l.b16 %v2261
        %v2298 = vunpack.c.l.b16 %v2262
        %v2299 = vunpack.c.l.b16 %v2263
        %v2300 = vunpack.c.l.b16 %v2264
        %v2301 = vunpack.c.l.b16 %v2265
        %v2302 = vunpack.c.l.b16 %v2266
        %v2303 = vunpack.c.l.b16 %v2267
        %v2304 = vunpack.c.l.b16 %v2268
        %v2305 = vpack.c.b16 %v2290, %v2289
        %v2306 = vpack.c.b16 %v2292, %v2291
        %v2307 = vpack.c.b16 %v2294, %v2293
        %v2308 = vpack.c.b16 %v2296, %v2295
        %v2309 = vpack.c.b16 %v2298, %v2297
        %v2310 = vpack.c.b16 %v2300, %v2299
        %v2311 = vpack.c.b16 %v2302, %v2301
        %v2312 = vpack.c.b16 %v2304, %v2303
        %2321 = vmatpush.bf16.msra.mxu0 %v2312
        %2322 = vmatpush.bf16.msra.mxu0 %v2311
        %2323 = vmatpush.bf16.msra.mxu0 %v2310
        %2324 = vmatpush.bf16.msra.mxu0 %v2309
        %2325 = vmatpush.bf16.msra.mxu0 %v2308
        %2326 = vmatpush.bf16.msra.mxu0 %v2307
        %2327 = vmatpush.bf16.msra.mxu0 %v2306
        %2328 = vmatpush.bf16.msra.mxu0 %v2305
        %2329 = vmatmul.bf16.gmra.mxu0 %v2237
        %v2330 = vpop.f32.mrf.mxu0
        %v2331 = vadd.f32 %v2271, %v2330
        %v2332 = vpop.f32.mrf.mxu0
        %v2333 = vadd.f32 %v2271, %v2332
        %2334 = vmatmul.bf16.gmra.mxu0 %v2238
        %v2335 = vpop.f32.mrf.mxu0
        %v2336 = vadd.f32 %v2271, %v2335
        %v2337 = vpop.f32.mrf.mxu0
        %v2338 = vadd.f32 %v2271, %v2337
        %2339 = vmatmul.bf16.gmra.mxu0 %v2239
        %v2340 = vpop.f32.mrf.mxu0
        %v2341 = vadd.f32 %v2271, %v2340
        %v2342 = vpop.f32.mrf.mxu0
        %v2343 = vadd.f32 %v2271, %v2342
        %2344 = vmatmul.bf16.gmra.mxu0 %v2240
        %v2345 = vpop.f32.mrf.mxu0
        %v2346 = vadd.f32 %v2271, %v2345
        %v2347 = vpop.f32.mrf.mxu0
        %v2348 = vadd.f32 %v2271, %v2347
        %2349 = vmatmul.bf16.gmra.mxu0 %v2241
        %v2350 = vpop.f32.mrf.mxu0
        %v2351 = vadd.f32 %v2271, %v2350
        %v2352 = vpop.f32.mrf.mxu0
        %v2353 = vadd.f32 %v2271, %v2352
        %2354 = vmatmul.bf16.gmra.mxu0 %v2242
        %v2355 = vpop.f32.mrf.mxu0
        %v2356 = vadd.f32 %v2271, %v2355
        %v2357 = vpop.f32.mrf.mxu0
        %v2358 = vadd.f32 %v2271, %v2357
        %2359 = vmatmul.bf16.gmra.mxu0 %v2243
        %v2360 = vpop.f32.mrf.mxu0
        %v2361 = vadd.f32 %v2271, %v2360
        %v2362 = vpop.f32.mrf.mxu0
        %v2363 = vadd.f32 %v2271, %v2362
        %2364 = vmatmul.bf16.gmra.mxu0 %v2244
        %v2365 = vpop.f32.mrf.mxu0
        %v2366 = vadd.f32 %v2271, %v2365
        %v2367 = vpop.f32.mrf.mxu0
        %v2368 = vadd.f32 %v2271, %v2367
        %2369 = vmatmul.bf16.gmra.mxu0 %v2245
        %v2370 = vpop.f32.mrf.mxu0
        %v2371 = vadd.f32 %v2271, %v2370
        %v2372 = vpop.f32.mrf.mxu0
        %v2373 = vadd.f32 %v2271, %v2372
        %2374 = vmatmul.bf16.gmra.mxu0 %v2246
        %v2375 = vpop.f32.mrf.mxu0
        %v2376 = vadd.f32 %v2271, %v2375
        %v2377 = vpop.f32.mrf.mxu0
        %v2378 = vadd.f32 %v2271, %v2377
        %2379 = vmatmul.bf16.gmra.mxu0 %v2247
        %v2380 = vpop.f32.mrf.mxu0
        %v2381 = vadd.f32 %v2271, %v2380
        %v2382 = vpop.f32.mrf.mxu0
        %v2383 = vadd.f32 %v2271, %v2382
        %2384 = vmatmul.bf16.gmra.mxu0 %v2248
        %v2385 = vpop.f32.mrf.mxu0
        %v2386 = vadd.f32 %v2271, %v2385
        %v2387 = vpop.f32.mrf.mxu0
        %v2388 = vadd.f32 %v2271, %v2387
        %2389 = vmatmul.bf16.gmra.mxu0 %v2249
        %v2390 = vpop.f32.mrf.mxu0
        %v2391 = vadd.f32 %v2271, %v2390
        %v2392 = vpop.f32.mrf.mxu0
        %v2393 = vadd.f32 %v2271, %v2392
        %2394 = vmatmul.bf16.gmra.mxu0 %v2250
        %v2395 = vpop.f32.mrf.mxu0
        %v2396 = vadd.f32 %v2271, %v2395
        %v2397 = vpop.f32.mrf.mxu0
        %v2398 = vadd.f32 %v2271, %v2397
        %2399 = vmatmul.bf16.gmra.mxu0 %v2251
        %v2400 = vpop.f32.mrf.mxu0
        %v2401 = vadd.f32 %v2271, %v2400
        %v2402 = vpop.f32.mrf.mxu0
        %v2403 = vadd.f32 %v2271, %v2402
        %2404 = vmatmul.bf16.gmra.mxu0 %v2252
        %v2405 = vpop.f32.mrf.mxu0
        %v2406 = vadd.f32 %v2271, %v2405
        %v2407 = vpop.f32.mrf.mxu0
        %v2408 = vadd.f32 %v2271, %v2407
        %2409 = vdwg.mxu0
        %v2410 = vmax.f32 %v2331, 0.0
        %v2411 = vmax.f32 %v2333, 0.0
        %v2412 = vmax.f32 %v2336, 0.0
        %v2413 = vmax.f32 %v2338, 0.0
        %v2414 = vmax.f32 %v2341, 0.0
        %v2415 = vmax.f32 %v2343, 0.0
        %v2416 = vmax.f32 %v2346, 0.0
        %v2417 = vmax.f32 %v2348, 0.0
        %v2418 = vmax.f32 %v2351, 0.0
        %v2419 = vmax.f32 %v2353, 0.0
        %v2420 = vmax.f32 %v2356, 0.0
        %v2421 = vmax.f32 %v2358, 0.0
        %v2422 = vmax.f32 %v2361, 0.0
        %v2423 = vmax.f32 %v2363, 0.0
        %v2424 = vmax.f32 %v2366, 0.0
        %v2425 = vmax.f32 %v2368, 0.0
        %v2426 = vmax.f32 %v2371, 0.0
        %v2427 = vmax.f32 %v2373, 0.0
        %v2428 = vmax.f32 %v2376, 0.0
        %v2429 = vmax.f32 %v2378, 0.0
        %v2430 = vmax.f32 %v2381, 0.0
        %v2431 = vmax.f32 %v2383, 0.0
        %v2432 = vmax.f32 %v2386, 0.0
        %v2433 = vmax.f32 %v2388, 0.0
        %v2434 = vmax.f32 %v2391, 0.0
        %v2435 = vmax.f32 %v2393, 0.0
        %v2436 = vmax.f32 %v2396, 0.0
        %v2437 = vmax.f32 %v2398, 0.0
        %v2438 = vmax.f32 %v2401, 0.0
        %v2439 = vmax.f32 %v2403, 0.0
        %v2440 = vmax.f32 %v2406, 0.0
        %v2441 = vmax.f32 %v2408, 0.0
        %v2442 = vpack.c.bf16 %v2411, %v2410
        %v2443 = vpack.c.bf16 %v2413, %v2412
        %v2444 = vpack.c.bf16 %v2415, %v2414
        %v2445 = vpack.c.bf16 %v2417, %v2416
        %v2446 = vpack.c.bf16 %v2419, %v2418
        %v2447 = vpack.c.bf16 %v2421, %v2420
        %v2448 = vpack.c.bf16 %v2423, %v2422
        %v2449 = vpack.c.bf16 %v2425, %v2424
        %v2450 = vpack.c.bf16 %v2427, %v2426
        %v2451 = vpack.c.bf16 %v2429, %v2428
        %v2452 = vpack.c.bf16 %v2431, %v2430
        %v2453 = vpack.c.bf16 %v2433, %v2432
        %v2454 = vpack.c.bf16 %v2435, %v2434
        %v2455 = vpack.c.bf16 %v2437, %v2436
        %v2456 = vpack.c.bf16 %v2439, %v2438
        %v2457 = vpack.c.bf16 %v2441, %v2440
        %v2458 = vld [vmem:[#allocation14] sm:$0xf]
        %v2459 = vld [vmem:[#allocation14 + $0x4] sm:$0xf]
        %v2460 = vld [vmem:[#allocation14 + $0x8] sm:$0xf]
        %v2461 = vld [vmem:[#allocation14 + $0xc] sm:$0xf]
        %v2462 = vld [vmem:[#allocation14 + $0x10] sm:$0xf]
        %v2463 = vld [vmem:[#allocation14 + $0x14] sm:$0xf]
        %v2464 = vld [vmem:[#allocation14 + $0x18] sm:$0xf]
        %v2465 = vld [vmem:[#allocation14 + $0x1c] sm:$0xf]
        %v2466 = vld [vmem:[#allocation14 + $0x20] sm:$0xf]
        %v2467 = vld [vmem:[#allocation14 + $0x24] sm:$0xf]
        %v2468 = vld [vmem:[#allocation14 + $0x28] sm:$0xf]
        %v2469 = vld [vmem:[#allocation14 + $0x2c] sm:$0xf]
        %v2470 = vld [vmem:[#allocation14 + $0x30] sm:$0xf]
        %v2471 = vld [vmem:[#allocation14 + $0x34] sm:$0xf]
        %v2472 = vld [vmem:[#allocation14 + $0x38] sm:$0xf]
        %v2473 = vld [vmem:[#allocation14 + $0x3c] sm:$0xf]
        %v2474 = vld [vmem:[%s13] sm:$0x1]
        %v2476 = vperm.slane %v2474, 0
        %v2494 = vunpack.c.l.b16 %v2458
        %v2495 = vunpack.c.l.b16 %v2459
        %v2496 = vunpack.c.l.b16 %v2460
        %v2497 = vunpack.c.l.b16 %v2461
        %v2498 = vunpack.c.l.b16 %v2462
        %v2499 = vunpack.c.l.b16 %v2463
        %v2500 = vunpack.c.l.b16 %v2464
        %v2501 = vunpack.c.l.b16 %v2465
        %v2502 = vunpack.c.l.b16 %v2466
        %v2503 = vunpack.c.l.b16 %v2467
        %v2504 = vunpack.c.l.b16 %v2468
        %v2505 = vunpack.c.l.b16 %v2469
        %v2506 = vunpack.c.l.b16 %v2470
        %v2507 = vunpack.c.l.b16 %v2471
        %v2508 = vunpack.c.l.b16 %v2472
        %v2509 = vunpack.c.l.b16 %v2473
        %v2510 = vpack.c.b16 %v2495, %v2494
        %v2511 = vpack.c.b16 %v2497, %v2496
        %v2512 = vpack.c.b16 %v2499, %v2498
        %v2513 = vpack.c.b16 %v2501, %v2500
        %v2514 = vpack.c.b16 %v2503, %v2502
        %v2515 = vpack.c.b16 %v2505, %v2504
        %v2516 = vpack.c.b16 %v2507, %v2506
        %v2517 = vpack.c.b16 %v2509, %v2508
        %2526 = vmatpush.bf16.msra.mxu0 %v2517
        %2527 = vmatpush.bf16.msra.mxu0 %v2516
        %2528 = vmatpush.bf16.msra.mxu0 %v2515
        %2529 = vmatpush.bf16.msra.mxu0 %v2514
        %2530 = vmatpush.bf16.msra.mxu0 %v2513
        %2531 = vmatpush.bf16.msra.mxu0 %v2512
        %2532 = vmatpush.bf16.msra.mxu0 %v2511
        %2533 = vmatpush.bf16.msra.mxu0 %v2510
        %2534 = vmatmul.bf16.gmra.mxu0 %v2442
        %v2535 = vpop.f32.mrf.mxu0
        %v2536 = vadd.f32 %v2476, %v2535
        %v2537 = vpop.f32.mrf.mxu0
        %v2538 = vadd.f32 %v2476, %v2537
        %2539 = vmatmul.bf16.gmra.mxu0 %v2443
        %v2540 = vpop.f32.mrf.mxu0
        %v2541 = vadd.f32 %v2476, %v2540
        %v2542 = vpop.f32.mrf.mxu0
        %v2543 = vadd.f32 %v2476, %v2542
        %2544 = vmatmul.bf16.gmra.mxu0 %v2444
        %v2545 = vpop.f32.mrf.mxu0
        %v2546 = vadd.f32 %v2476, %v2545
        %v2547 = vpop.f32.mrf.mxu0
        %v2548 = vadd.f32 %v2476, %v2547
        %2549 = vmatmul.bf16.gmra.mxu0 %v2445
        %v2550 = vpop.f32.mrf.mxu0
        %v2551 = vadd.f32 %v2476, %v2550
        %v2552 = vpop.f32.mrf.mxu0
        %v2553 = vadd.f32 %v2476, %v2552
        %2554 = vmatmul.bf16.gmra.mxu0 %v2446
        %v2555 = vpop.f32.mrf.mxu0
        %v2556 = vadd.f32 %v2476, %v2555
        %v2557 = vpop.f32.mrf.mxu0
        %v2558 = vadd.f32 %v2476, %v2557
        %2559 = vmatmul.bf16.gmra.mxu0 %v2447
        %v2560 = vpop.f32.mrf.mxu0
        %v2561 = vadd.f32 %v2476, %v2560
        %v2562 = vpop.f32.mrf.mxu0
        %v2563 = vadd.f32 %v2476, %v2562
        %2564 = vmatmul.bf16.gmra.mxu0 %v2448
        %v2565 = vpop.f32.mrf.mxu0
        %v2566 = vadd.f32 %v2476, %v2565
        %v2567 = vpop.f32.mrf.mxu0
        %v2568 = vadd.f32 %v2476, %v2567
        %2569 = vmatmul.bf16.gmra.mxu0 %v2449
        %v2570 = vpop.f32.mrf.mxu0
        %v2571 = vadd.f32 %v2476, %v2570
        %v2572 = vpop.f32.mrf.mxu0
        %v2573 = vadd.f32 %v2476, %v2572
        %2574 = vmatmul.bf16.gmra.mxu0 %v2450
        %v2575 = vpop.f32.mrf.mxu0
        %v2576 = vadd.f32 %v2476, %v2575
        %v2577 = vpop.f32.mrf.mxu0
        %v2578 = vadd.f32 %v2476, %v2577
        %2579 = vmatmul.bf16.gmra.mxu0 %v2451
        %v2580 = vpop.f32.mrf.mxu0
        %v2581 = vadd.f32 %v2476, %v2580
        %v2582 = vpop.f32.mrf.mxu0
        %v2583 = vadd.f32 %v2476, %v2582
        %2584 = vmatmul.bf16.gmra.mxu0 %v2452
        %v2585 = vpop.f32.mrf.mxu0
        %v2586 = vadd.f32 %v2476, %v2585
        %v2587 = vpop.f32.mrf.mxu0
        %v2588 = vadd.f32 %v2476, %v2587
        %2589 = vmatmul.bf16.gmra.mxu0 %v2453
        %v2590 = vpop.f32.mrf.mxu0
        %v2591 = vadd.f32 %v2476, %v2590
        %v2592 = vpop.f32.mrf.mxu0
        %v2593 = vadd.f32 %v2476, %v2592
        %2594 = vmatmul.bf16.gmra.mxu0 %v2454
        %v2595 = vpop.f32.mrf.mxu0
        %v2596 = vadd.f32 %v2476, %v2595
        %v2597 = vpop.f32.mrf.mxu0
        %v2598 = vadd.f32 %v2476, %v2597
        %2599 = vmatmul.bf16.gmra.mxu0 %v2455
        %v2600 = vpop.f32.mrf.mxu0
        %v2601 = vadd.f32 %v2476, %v2600
        %v2602 = vpop.f32.mrf.mxu0
        %v2603 = vadd.f32 %v2476, %v2602
        %2604 = vmatmul.bf16.gmra.mxu0 %v2456
        %v2605 = vpop.f32.mrf.mxu0
        %v2606 = vadd.f32 %v2476, %v2605
        %v2607 = vpop.f32.mrf.mxu0
        %v2608 = vadd.f32 %v2476, %v2607
        %2609 = vmatmul.bf16.gmra.mxu0 %v2457
        %v2610 = vpop.f32.mrf.mxu0
        %v2611 = vadd.f32 %v2476, %v2610
        %v2612 = vpop.f32.mrf.mxu0
        %v2613 = vadd.f32 %v2476, %v2612
        %2614 = vdwg.mxu0
        %v2615 = vpack.c.bf16 %v2536, %v2536
        %v2616 = vpack.c.bf16 %v2538, %v2538
        %v2617 = vpack.c.bf16 %v2541, %v2541
        %v2618 = vpack.c.bf16 %v2543, %v2543
        %v2619 = vpack.c.bf16 %v2546, %v2546
        %v2620 = vpack.c.bf16 %v2548, %v2548
        %v2621 = vpack.c.bf16 %v2551, %v2551
        %v2622 = vpack.c.bf16 %v2553, %v2553
        %v2623 = vpack.c.bf16 %v2556, %v2556
        %v2624 = vpack.c.bf16 %v2558, %v2558
        %v2625 = vpack.c.bf16 %v2561, %v2561
        %v2626 = vpack.c.bf16 %v2563, %v2563
        %v2627 = vpack.c.bf16 %v2566, %v2566
        %v2628 = vpack.c.bf16 %v2568, %v2568
        %v2629 = vpack.c.bf16 %v2571, %v2571
        %v2630 = vpack.c.bf16 %v2573, %v2573
        %v2631 = vpack.c.bf16 %v2576, %v2576
        %v2632 = vpack.c.bf16 %v2578, %v2578
        %v2633 = vpack.c.bf16 %v2581, %v2581
        %v2634 = vpack.c.bf16 %v2583, %v2583
        %v2635 = vpack.c.bf16 %v2586, %v2586
        %v2636 = vpack.c.bf16 %v2588, %v2588
        %v2637 = vpack.c.bf16 %v2591, %v2591
        %v2638 = vpack.c.bf16 %v2593, %v2593
        %v2639 = vpack.c.bf16 %v2596, %v2596
        %v2640 = vpack.c.bf16 %v2598, %v2598
        %v2641 = vpack.c.bf16 %v2601, %v2601
        %v2642 = vpack.c.bf16 %v2603, %v2603
        %v2643 = vpack.c.bf16 %v2606, %v2606
        %v2644 = vpack.c.bf16 %v2608, %v2608
        %v2645 = vpack.c.bf16 %v2611, %v2611
        %v2646 = vpack.c.bf16 %v2613, %v2613
        %2647 = vst [vmem:[%s628] sm:$0xf] %v2615
        %2648 = vst [vmem:[%s628 + $0x4] sm:$0xf] %v2616
        %2649 = vst [vmem:[%s628 + $0x8] sm:$0xf] %v2617
        %2650 = vst [vmem:[%s628 + $0xc] sm:$0xf] %v2618
        %2651 = vst [vmem:[%s628 + $0x10] sm:$0xf] %v2619
        %2652 = vst [vmem:[%s628 + $0x14] sm:$0xf] %v2620
        %2653 = vst [vmem:[%s628 + $0x18] sm:$0xf] %v2621
        %2654 = vst [vmem:[%s628 + $0x1c] sm:$0xf] %v2622
        %2655 = vst [vmem:[%s628 + $0x20] sm:$0xf] %v2623
        %2656 = vst [vmem:[%s628 + $0x24] sm:$0xf] %v2624
        %2657 = vst [vmem:[%s628 + $0x28] sm:$0xf] %v2625
        %2658 = vst [vmem:[%s628 + $0x2c] sm:$0xf] %v2626
        %2659 = vst [vmem:[%s628 + $0x30] sm:$0xf] %v2627
        %2660 = vst [vmem:[%s628 + $0x34] sm:$0xf] %v2628
        %2661 = vst [vmem:[%s628 + $0x38] sm:$0xf] %v2629
        %2662 = vst [vmem:[%s628 + $0x3c] sm:$0xf] %v2630
        %2663 = vst [vmem:[%s628 + $0x40] sm:$0xf] %v2631
        %2664 = vst [vmem:[%s628 + $0x44] sm:$0xf] %v2632
        %2665 = vst [vmem:[%s628 + $0x48] sm:$0xf] %v2633
        %2666 = vst [vmem:[%s628 + $0x4c] sm:$0xf] %v2634
        %2667 = vst [vmem:[%s628 + $0x50] sm:$0xf] %v2635
        %2668 = vst [vmem:[%s628 + $0x54] sm:$0xf] %v2636
        %2669 = vst [vmem:[%s628 + $0x58] sm:$0xf] %v2637
        %2670 = vst [vmem:[%s628 + $0x5c] sm:$0xf] %v2638
        %2671 = vst [vmem:[%s628 + $0x60] sm:$0xf] %v2639
        %2672 = vst [vmem:[%s628 + $0x64] sm:$0xf] %v2640
        %2673 = vst [vmem:[%s628 + $0x68] sm:$0xf] %v2641
        %2674 = vst [vmem:[%s628 + $0x6c] sm:$0xf] %v2642
        %2675 = vst [vmem:[%s628 + $0x70] sm:$0xf] %v2643
        %2676 = vst [vmem:[%s628 + $0x74] sm:$0xf] %v2644
        %2677 = vst [vmem:[%s628 + $0x78] sm:$0xf] %v2645
        %2678 = vst [vmem:[%s628 + $0x7c] sm:$0xf] %v2646
        %s2679 = sand.u32 %s349, 1
        %s2680 = scalar_lea.sflag [#allocation4], %s2679
        %s2681 = sand.u32 %s349, 1
        %s2682 = smul.addr %s2681, 128
        %s2683 = scalar_lea.vmem [#allocation16], %s2682
        // Predicated region
        $region109: #{tpu_custom_call.1} parent=75 // pred_check
          %p2684 = pneg %p359
        $region110: #{tpu_custom_call.1} parent=75 // pred_check_branch
          %2686 = sbr.rel (%p2684) target = $region112
        $region111: #{tpu_custom_call.1} parent=75 // pred_region
          %2688 = vsyncadd %s2680, 0
          %s2689 = smul.addr %s37, 32
          %s2690 = smul.addr %s2689, 4
          %s2691 = scalar_lea.hbm %s14, %s2690
          %s2692 = sshll.u32 %s2683, 4
          %s2693 = int_to_ptr.vmem [resolvable:$true] %s2692
          %s2694 = sshll.u32 %s2691, 4
          %s2695 = int_to_ptr.hbm [resolvable:$true] %s2694
          %2700 = dma.vmem_to_hbm [thread:$0]  %s2693, 2048, %s2695, %s2680, 64, 64, 4
        $region112: #{tpu_custom_call.1} parent=75 // pred_fallthru
          _
      $region76: #{tpu_custom_call.1} parent=5 // pred_fallthru
        _
      %p2701 = scmp.le.s32.totalorder 2, %s32
      // Predicated region
      $region113: #{tpu_custom_call.1} parent=5 // pred_check
        %p2702 = pneg %p2701
      $region114: #{tpu_custom_call.1} parent=5 // pred_check_branch
        %2704 = sbr.rel (%p2702) target = $region116
      $region115: #{tpu_custom_call.1} parent=5 // pred_region
        %s2705 = ssub.s32 %s32, 2
        // Predicated region
        $region117: #{tpu_custom_call.1} parent=115 // pred_check
          %p2706 = pneg %p365
        $region118: #{tpu_custom_call.1} parent=115 // pred_check_branch
          %2708 = sbr.rel (%p2706) target = $region120
        $region119: #{tpu_custom_call.1} parent=115 // pred_region
          %s2709 = sand.u32 %s350, 1
          %s2710 = scalar_lea.sflag [#allocation4], %s2709
          %s2711 = sand.u32 %s350, 1
          %s2712 = smul.addr %s2711, 128
          %s2713 = scalar_lea.vmem [#allocation16], %s2712
          %2715 = dma.done %s2710, 2048
        $region120: #{tpu_custom_call.1} parent=115 // pred_fallthru
          _
      $region116: #{tpu_custom_call.1} parent=5 // pred_fallthru
        _
    $region6: #{tpu_custom_call.1} parent=1 // loop_footer
      %s36 = sadd.s32 1, %s32
    $region7: #{tpu_custom_call.1} parent=1 // loop_footer_branch
      %31 = sbr.rel target = $region3
    $region8: #{tpu_custom_call.1} parent=1 // loop_exit
      _
    %2716 = vsyncpa [#allocation3], 1
    %s2717 = scalar_lea.sflag [#allocation3], 1
    %2718 = vsyncpa %s2717, 1
    %2719 = vsyncpa [#allocation6], 1
    %s2720 = scalar_lea.sflag [#allocation6], 1
    %2721 = vsyncpa %s2720, 1
    %2722 = vsyncpa [#allocation9], 1
    %2723 = vsyncpa [#allocation12], 1
    %2724 = vsyncpa [#allocation15], 1
    %2725 = vsyncpa [#allocation4], 1
    %s2726 = scalar_lea.sflag [#allocation4], 1
    %2727 = vsyncpa %s2726, 1

</llo_original>
